<compile_context>
chip_gen: v7x
topology: tpu7x:2x2x1
jax: 0.10.0
libtpu: 0.0.40
codegen_flags: <defaults>
</compile_context>

<pallas_src>
import functools

import jax
import jax.numpy as jnp
from jax import lax
from jax.experimental import pallas as pl
from jax.experimental.pallas import tpu as pltpu

# ----------------------- module constants (from the PyTorch module) -----------------------
NUM_UNET_LAYERS = 16            # len(UNET_LAYERS) in the reference repo
PROJECTION_DIMENSION = 768      # output_dim before output_bypass doubling
H_DIM = 64                      # hidden dim for arch_time_net == 15
POSE_ENCODE_DIM = 64            # Fourier encoding dim ('15' -> 64)
NUM_W = POSE_ENCODE_DIM // 2    # 32 random frequencies
SIGMAS = (0.03, 1.0, 0.05)      # (sigma_t, sigma_l, sigma_time)
LEAKY_SLOPE = 0.01              # nn.LeakyReLU() default
LN_EPS = 1e-5                   # nn.LayerNorm default
OUTPUT_BYPASS_ALPHA = 0.2
OUT_DIM = 2 * PROJECTION_DIMENSION  # output_bypass=True doubles the projection (1536)
PROJ = PROJECTION_DIMENSION

# Row layout of the packed (16, 64) "vecs" parameter array.
ROW_WF0, ROW_WF1, ROW_WF2 = 0, 1, 2     # Fourier freq rows (scaling folded in; lanes 0:NUM_W valid)
ROW_B1, ROW_G1, ROW_BE1 = 3, 4, 5       # Linear1 bias, LN1 gamma, LN1 beta
ROW_B2, ROW_G2, ROW_BE2 = 6, 7, 8       # Linear2 bias, LN2 gamma, LN2 beta
ROW_PB = 9                              # folded projection bias row: -(wf0 + wf1)
VECS_ROWS = 16                          # padded to a sublane multiple


def _num_output_blocks() -> int:
    """2 column blocks (one per TensorCore) on 2-TC chips (v7x); 1 on single-TC v5e/v6e."""
    try:
        kind = jax.devices()[0].device_kind.lower()
    except Exception:
        return 1
    return 2 if ("v7" in kind or "7x" in kind) else 1


def _layernorm(x, gamma, beta):
    mu = jnp.mean(x, axis=-1, keepdims=True)
    var = jnp.mean((x - mu) ** 2, axis=-1, keepdims=True)
    return (x - mu) * lax.rsqrt(var + LN_EPS) * gamma + beta


def _leaky_relu(x):
    return jnp.where(x > 0, x, LEAKY_SLOPE * x)


def neti_mapper_kernel(scalars_ref,   # (Bp, 3)  f32: [timestep, unet_layer, frames_gap] (raw)
                       vecs_ref,      # (16, 64) f32: packed (folded) Fourier rows + biases/LN params
                       w1_ref,        # (64, 64) bf16: rows 0:32 multiply sin, 32:64 multiply cos
                       w2_ref,        # (64, 64) bf16
                       wo_ref,        # (64, nb*768) bf16: this grid step's output-proj columns
                       bo_ref,        # (1, nb*768)  f32
                       out_ref,       # (nb, Bp, 768) f32
                       *, nb):
    # --- positional encoding (affine scaling already folded into wf0/wf1/pbias) ---
    ts = scalars_ref[:, 0:1]                                    # (Bp,1) raw timestep
    ly = scalars_ref[:, 1:2]                                    # (Bp,1) raw unet layer
    fg = scalars_ref[:, 2:3]                                    # (Bp,1) frames gap (passed through)

    wf0 = vecs_ref[ROW_WF0:ROW_WF0 + 1, 0:NUM_W]
    wf1 = vecs_ref[ROW_WF1:ROW_WF1 + 1, 0:NUM_W]
    wf2 = vecs_ref[ROW_WF2:ROW_WF2 + 1, 0:NUM_W]
    pbias = vecs_ref[ROW_PB:ROW_PB + 1, 0:NUM_W]
    proj = ts * wf0 + ly * wf1 + fg * wf2 + pbias               # (Bp, NUM_W), broadcast-MACs (K=3)

    # --- self.net ---
    # concat([sin, cos]) @ W1  ==  sin @ W1[:32] + cos @ W1[32:]   (no lane concat / relayout)
    sin_p = jnp.sin(proj).astype(jnp.bfloat16)
    cos_p = jnp.cos(proj).astype(jnp.bfloat16)
    h = (jnp.dot(sin_p, w1_ref[0:NUM_W, :], preferred_element_type=jnp.float32)
         + jnp.dot(cos_p, w1_ref[NUM_W:2 * NUM_W, :], preferred_element_type=jnp.float32)
         + vecs_ref[ROW_B1:ROW_B1 + 1, :])
    h = _leaky_relu(_layernorm(h,
                               vecs_ref[ROW_G1:ROW_G1 + 1, :],
                               vecs_ref[ROW_BE1:ROW_BE1 + 1, :]))

    h = (jnp.dot(h.astype(jnp.bfloat16), w2_ref[...], preferred_element_type=jnp.float32)
         + vecs_ref[ROW_B2:ROW_B2 + 1, :])
    h = _leaky_relu(_layernorm(h,
                               vecs_ref[ROW_G2:ROW_G2 + 1, :],
                               vecs_ref[ROW_BE2:ROW_BE2 + 1, :]))

    # --- self.output_layer: nb lane-dense 768-wide column blocks in this grid step ---
    h_b = h.astype(jnp.bfloat16)
    for cb in range(nb):   # static Python loop (nb in {1, 2})
        w_blk = wo_ref[:, cb * PROJ:(cb + 1) * PROJ]            # 128-aligned static column slice
        b_blk = bo_ref[:, cb * PROJ:(cb + 1) * PROJ]
        o = jnp.dot(h_b, w_blk, preferred_element_type=jnp.float32) + b_blk
        out_ref[cb] = o.astype(out_ref.dtype)                   # (Bp, 768) unmasked lane-dense store


def init_params(key):
    """Deterministic synthetic parameter init (shapes match the PyTorch module)."""
    ks = jax.random.split(key, 4)
    # Fourier frequencies: randn(NUM_W, nfeats) with per-column sigma scaling -> stored as (3, NUM_W)
    wf = jax.random.normal(ks[0], (NUM_W, 3), jnp.float32) * jnp.asarray(SIGMAS, jnp.float32)
    wf = wf.T  # (3, NUM_W)

    def lin(k, fan_in, fan_out):
        kw, kb = jax.random.split(k)
        scale = 1.0 / jnp.sqrt(fan_in)
        w = jax.random.uniform(kw, (fan_in, fan_out), jnp.float32, -scale, scale)
        b = jax.random.uniform(kb, (fan_out,), jnp.float32, -scale, scale)
        return w, b

    w1, b1 = lin(ks[1], POSE_ENCODE_DIM, H_DIM)
    w2, b2 = lin(ks[2], H_DIM, H_DIM)
    wo, bo = lin(ks[3], H_DIM, OUT_DIM)

    # Fold the per-call affine scaling (t/1000*2-1, l/NUM_UNET_LAYERS*2-1) into the Fourier params:
    #   proj = ts*(wf0*2/1000) + ly*(wf1*2/NUM_UNET_LAYERS) + fg*wf2 + (-(wf0 + wf1))
    wf0_f = wf[0] * (2.0 / 1000.0)
    wf1_f = wf[1] * (2.0 / NUM_UNET_LAYERS)
    pbias = -(wf[0] + wf[1])

    # Pack all the small vectors into one (16, 64) f32 array.
    vecs = jnp.zeros((VECS_ROWS, H_DIM), jnp.float32)
    vecs = vecs.at[ROW_WF0, 0:NUM_W].set(wf0_f)
    vecs = vecs.at[ROW_WF1, 0:NUM_W].set(wf1_f)
    vecs = vecs.at[ROW_WF2, 0:NUM_W].set(wf[2])
    vecs = vecs.at[ROW_PB, 0:NUM_W].set(pbias)
    vecs = vecs.at[ROW_B1].set(b1)
    vecs = vecs.at[ROW_G1].set(1.0)   # LN1 gamma
    # ROW_BE1 stays zero (LN1 beta)
    vecs = vecs.at[ROW_B2].set(b2)
    vecs = vecs.at[ROW_G2].set(1.0)   # LN2 gamma
    # ROW_BE2 stays zero (LN2 beta)

    return dict(
        vecs=vecs,
        w1=w1.astype(jnp.bfloat16),
        w2=w2.astype(jnp.bfloat16),
        wo=wo.astype(jnp.bfloat16),
        bo=bo.reshape(1, OUT_DIM),
        wf_orig=wf,                   # un-folded Fourier freqs, only for the pure-JAX reference
    )


@jax.jit
def neti_mapper_forward(timestep, unet_layer, normalized_frames_gap, params):
    """Returns MapperOutput fields as a dict (word_embedding, bypass_output, alpha)."""
    B = timestep.shape[0]
    scalars = jnp.stack([timestep.astype(jnp.float32),
                         unet_layer.astype(jnp.float32),
                         normalized_frames_gap.astype(jnp.float32)], axis=1)   # (B, 3)

    # Pad batch to a multiple of 16 (bf16 packs 16 rows/vreg -> clean packed MXU operands).
    Bp = max(16, ((B + 15) // 16) * 16)
    if Bp != B:
        scalars = jnp.pad(scalars, ((0, Bp - B), (0, 0)))

    num_blocks = _num_output_blocks()          # 2 on v7x (one 768-block per TC), else 1
    nb = (OUT_DIM // PROJ) // num_blocks       # column blocks computed per grid step

    out = pl.pallas_call(
        functools.partial(neti_mapper_kernel, nb=nb),
        out_shape=jax.ShapeDtypeStruct((2, Bp, PROJ), jnp.float32),
        grid_spec=pltpu.PrefetchScalarGridSpec(
            num_scalar_prefetch=0,
            grid=(num_blocks,),
            in_specs=[
                pl.BlockSpec((Bp, 3), lambda j: (0, 0)),
                pl.BlockSpec((VECS_ROWS, H_DIM), lambda j: (0, 0)),
                pl.BlockSpec((POSE_ENCODE_DIM, H_DIM), lambda j: (0, 0)),
                pl.BlockSpec((H_DIM, H_DIM), lambda j: (0, 0)),
                pl.BlockSpec((H_DIM, nb * PROJ), lambda j: (0, j)),
                pl.BlockSpec((1, nb * PROJ), lambda j: (0, j)),
            ],
            out_specs=pl.BlockSpec((nb, Bp, PROJ), lambda j: (j, 0, 0)),
        ),
        compiler_params=pltpu.CompilerParams(
            dimension_semantics=("parallel",)),
    )(scalars, params["vecs"], params["w1"], params["w2"], params["wo"], params["bo"])

    # output_bypass split (norm_scale=None, human_action=None in this config): plain indices,
    # no strided column-slice copies.
    word_embedding = out[0, :B]
    bypass_output = out[1, :B]
    return {
        "word_embedding": word_embedding,
        "bypass_output": bypass_output,
        "bypass_unconstrained": False,
        "output_bypass_alpha": OUTPUT_BYPASS_ALPHA,
    }


def _reference_forward(timestep, unet_layer, frames_gap, p):
    """Pure-JAX f32 reference of the original module math (same bf16 weights, upcast)."""
    B = timestep.shape[0]
    t = timestep.astype(jnp.float32).reshape(B, 1) / 1000.0 * 2.0 - 1.0
    l = unet_layer.astype(jnp.float32).reshape(B, 1) / NUM_UNET_LAYERS * 2.0 - 1.0
    f = frames_gap.astype(jnp.float32).reshape(B, 1)
    data = jnp.concatenate([t, l, f], axis=1)                    # (B,3)
    proj = data @ p["wf_orig"]                                   # (B, NUM_W)
    enc = jnp.concatenate([jnp.sin(proj), jnp.cos(proj)], axis=1)
    b1, g1, be1 = p["vecs"][ROW_B1], p["vecs"][ROW_G1], p["vecs"][ROW_BE1]
    b2, g2, be2 = p["vecs"][ROW_B2], p["vecs"][ROW_G2], p["vecs"][ROW_BE2]
    h = enc @ p["w1"].astype(jnp.float32) + b1
    h = _leaky_relu(_layernorm(h, g1, be1))
    h = h @ p["w2"].astype(jnp.float32) + b2
    h = _leaky_relu(_layernorm(h, g2, be2))
    return h @ p["wo"].astype(jnp.float32) + p["bo"]


if __name__ == "__main__":
    key = jax.random.PRNGKey(0)
    kp, kt, kl, kf = jax.random.split(key, 4)

    B = 8
    params = init_params(kp)
    timestep = jax.random.randint(kt, (B,), 0, 1000).astype(jnp.float32)
    unet_layer = jax.random.randint(kl, (B,), 0, NUM_UNET_LAYERS).astype(jnp.float32)
    frames_gap = jax.random.uniform(kf, (B,), jnp.float32, -1.0, 1.0)

    out = neti_mapper_forward(timestep, unet_layer, frames_gap, params)
    jax.block_until_ready(out)

    # sanity check against pure-JAX reference (tolerance covers bf16 activation casts)
    ref = _reference_forward(timestep, unet_layer, frames_gap, params)
    full = jnp.concatenate([out["word_embedding"], out["bypass_output"]], axis=1)
    assert full.shape == (B, OUT_DIM)
    err = float(jnp.max(jnp.abs(full - ref)))
    assert err < 1e-2, f"kernel mismatch vs reference: {err}"

    print("KERNEL_OK")
</pallas_src>

<mosaic_0001>
module attributes {stable_mosaic.version = 11 : i64} {
  func.func @neti_mapper_kernel(%arg0: i32, %arg1: memref<16x3xf32, #tpu.memory_space<vmem>>, %arg2: memref<16x64xf32, #tpu.memory_space<vmem>>, %arg3: memref<64x64xbf16, #tpu.memory_space<vmem>>, %arg4: memref<64x64xbf16, #tpu.memory_space<vmem>>, %arg5: memref<64x1536xbf16, #tpu.memory_space<vmem>>, %arg6: memref<1x1536xf32, #tpu.memory_space<vmem>>, %arg7: memref<2x16x768xf32, #tpu.memory_space<vmem>>) attributes {dimension_semantics = [#tpu.dimension_semantics<parallel>], iteration_bounds = array<i64: 1>, scalar_prefetch = 0 : i64, scratch_operands = 0 : i64, tpu.core_type = #tpu.core_type<tc>, window_params = [{pipeline_mode = #tpu.pipeline_mode<synchronous>, transform_indices = @transform_0, window_bounds = array<i64: 16, 3>}, {pipeline_mode = #tpu.pipeline_mode<synchronous>, transform_indices = @transform_1, window_bounds = array<i64: 16, 64>}, {pipeline_mode = #tpu.pipeline_mode<synchronous>, transform_indices = @transform_2, window_bounds = array<i64: 64, 64>}, {pipeline_mode = #tpu.pipeline_mode<synchronous>, transform_indices = @transform_3, window_bounds = array<i64: 64, 64>}, {transform_indices = @transform_4, window_bounds = array<i64: 64, 1536>}, {transform_indices = @transform_5, window_bounds = array<i64: 1, 1536>}, {transform_indices = @transform_6, window_bounds = array<i64: 2, 16, 768>}]} {
    %c0 = arith.constant 0 : index
    %c0_0 = arith.constant 0 : index
    %0 = vector.load %arg1[%c0, %c0_0] : memref<16x3xf32, #tpu.memory_space<vmem>>, vector<16x1xf32>
    %c0_1 = arith.constant 0 : index
    %c1 = arith.constant 1 : index
    %1 = vector.load %arg1[%c0_1, %c1] : memref<16x3xf32, #tpu.memory_space<vmem>>, vector<16x1xf32>
    %c0_2 = arith.constant 0 : index
    %c2 = arith.constant 2 : index
    %2 = vector.load %arg1[%c0_2, %c2] : memref<16x3xf32, #tpu.memory_space<vmem>>, vector<16x1xf32>
    %c0_3 = arith.constant 0 : index
    %c0_4 = arith.constant 0 : index
    %3 = vector.load %arg2[%c0_3, %c0_4] : memref<16x64xf32, #tpu.memory_space<vmem>>, vector<1x32xf32>
    %c1_5 = arith.constant 1 : index
    %c0_6 = arith.constant 0 : index
    %4 = vector.load %arg2[%c1_5, %c0_6] : memref<16x64xf32, #tpu.memory_space<vmem>>, vector<1x32xf32>
    %c2_7 = arith.constant 2 : index
    %c0_8 = arith.constant 0 : index
    %5 = vector.load %arg2[%c2_7, %c0_8] : memref<16x64xf32, #tpu.memory_space<vmem>>, vector<1x32xf32>
    %c9 = arith.constant 9 : index
    %c0_9 = arith.constant 0 : index
    %6 = vector.load %arg2[%c9, %c0_9] : memref<16x64xf32, #tpu.memory_space<vmem>>, vector<1x32xf32>
    %7 = vector.broadcast %0 : vector<16x1xf32> to vector<16x32xf32>
    %8 = vector.broadcast %3 : vector<1x32xf32> to vector<16x32xf32>
    %9 = arith.mulf %7, %8 : vector<16x32xf32>
    %10 = vector.broadcast %1 : vector<16x1xf32> to vector<16x32xf32>
    %11 = vector.broadcast %4 : vector<1x32xf32> to vector<16x32xf32>
    %12 = arith.mulf %10, %11 : vector<16x32xf32>
    %13 = arith.addf %9, %12 : vector<16x32xf32>
    %14 = vector.broadcast %2 : vector<16x1xf32> to vector<16x32xf32>
    %15 = vector.broadcast %5 : vector<1x32xf32> to vector<16x32xf32>
    %16 = arith.mulf %14, %15 : vector<16x32xf32>
    %17 = arith.addf %13, %16 : vector<16x32xf32>
    %18 = vector.broadcast %6 : vector<1x32xf32> to vector<16x32xf32>
    %19 = arith.addf %17, %18 : vector<16x32xf32>
    %20 = math.sin %19 : vector<16x32xf32>
    %21 = arith.truncf %20 : vector<16x32xf32> to vector<16x32xbf16>
    %22 = math.cos %19 : vector<16x32xf32>
    %23 = arith.truncf %22 : vector<16x32xf32> to vector<16x32xbf16>
    %c0_10 = arith.constant 0 : index
    %c0_11 = arith.constant 0 : index
    %24 = vector.load %arg3[%c0_10, %c0_11] : memref<64x64xbf16, #tpu.memory_space<vmem>>, vector<32x64xbf16>
    %cst = arith.constant dense<0.000000e+00> : vector<16x64xf32>
    %25 = tpu.matmul %21, %24, %cst {dimension_numbers = #tpu.dot_dimension_numbers<[1], [0], [0], [1], [0, 0, 1, 1], [], []>} : vector<16x32xbf16>, vector<32x64xbf16>, vector<16x64xf32> -> vector<16x64xf32>
    %c32 = arith.constant 32 : index
    %c0_12 = arith.constant 0 : index
    %26 = vector.load %arg3[%c32, %c0_12] : memref<64x64xbf16, #tpu.memory_space<vmem>>, vector<32x64xbf16>
    %cst_13 = arith.constant dense<0.000000e+00> : vector<16x64xf32>
    %27 = tpu.matmul %23, %26, %cst_13 {dimension_numbers = #tpu.dot_dimension_numbers<[1], [0], [0], [1], [0, 0, 1, 1], [], []>} : vector<16x32xbf16>, vector<32x64xbf16>, vector<16x64xf32> -> vector<16x64xf32>
    %28 = arith.addf %25, %27 : vector<16x64xf32>
    %c3 = arith.constant 3 : index
    %c0_14 = arith.constant 0 : index
    %29 = vector.load %arg2[%c3, %c0_14] : memref<16x64xf32, #tpu.memory_space<vmem>>, vector<1x64xf32>
    %30 = vector.broadcast %29 : vector<1x64xf32> to vector<16x64xf32>
    %31 = arith.addf %28, %30 : vector<16x64xf32>
    %c4 = arith.constant 4 : index
    %c0_15 = arith.constant 0 : index
    %32 = vector.load %arg2[%c4, %c0_15] : memref<16x64xf32, #tpu.memory_space<vmem>>, vector<1x64xf32>
    %c5 = arith.constant 5 : index
    %c0_16 = arith.constant 0 : index
    %33 = vector.load %arg2[%c5, %c0_16] : memref<16x64xf32, #tpu.memory_space<vmem>>, vector<1x64xf32>
    %cst_17 = arith.constant dense<0.000000e+00> : vector<16xf32>
    %34 = vector.multi_reduction <add>, %31, %cst_17 [1] : vector<16x64xf32> to vector<16xf32>
    %35 = vector.shape_cast %34 : vector<16xf32> to vector<16x1xf32>
    %cst_18 = arith.constant 6.400000e+01 : f32
    %36 = vector.broadcast %cst_18 : f32 to vector<16x1xf32>
    %37 = arith.divf %35, %36 : vector<16x1xf32>
    %38 = vector.broadcast %37 : vector<16x1xf32> to vector<16x64xf32>
    %39 = arith.subf %31, %38 : vector<16x64xf32>
    %40 = arith.mulf %39, %39 : vector<16x64xf32>
    %cst_19 = arith.constant dense<0.000000e+00> : vector<16xf32>
    %41 = vector.multi_reduction <add>, %40, %cst_19 [1] : vector<16x64xf32> to vector<16xf32>
    %42 = vector.shape_cast %41 : vector<16xf32> to vector<16x1xf32>
    %cst_20 = arith.constant 6.400000e+01 : f32
    %43 = vector.broadcast %cst_20 : f32 to vector<16x1xf32>
    %44 = arith.divf %42, %43 : vector<16x1xf32>
    %45 = vector.broadcast %37 : vector<16x1xf32> to vector<16x64xf32>
    %46 = arith.subf %31, %45 : vector<16x64xf32>
    %cst_21 = arith.constant 9.99999974E-6 : f32
    %47 = vector.broadcast %cst_21 : f32 to vector<16x1xf32>
    %48 = arith.addf %44, %47 : vector<16x1xf32>
    %49 = math.rsqrt %48 : vector<16x1xf32>
    %50 = vector.broadcast %49 : vector<16x1xf32> to vector<16x64xf32>
    %51 = arith.mulf %46, %50 : vector<16x64xf32>
    %52 = vector.broadcast %32 : vector<1x64xf32> to vector<16x64xf32>
    %53 = arith.mulf %51, %52 : vector<16x64xf32>
    %54 = vector.broadcast %33 : vector<1x64xf32> to vector<16x64xf32>
    %55 = arith.addf %53, %54 : vector<16x64xf32>
    %cst_22 = arith.constant 0.000000e+00 : f32
    %56 = vector.broadcast %cst_22 : f32 to vector<16x64xf32>
    %57 = arith.cmpf ogt, %55, %56 : vector<16x64xf32>
    %cst_23 = arith.constant 0.00999999977 : f32
    %58 = vector.broadcast %cst_23 : f32 to vector<16x64xf32>
    %59 = arith.mulf %58, %55 : vector<16x64xf32>
    %60 = arith.select %57, %55, %59 : vector<16x64xi1>, vector<16x64xf32>
    %61 = arith.truncf %60 : vector<16x64xf32> to vector<16x64xbf16>
    %c0_24 = arith.constant 0 : index
    %c0_25 = arith.constant 0 : index
    %62 = vector.load %arg4[%c0_24, %c0_25] : memref<64x64xbf16, #tpu.memory_space<vmem>>, vector<64x64xbf16>
    %cst_26 = arith.constant dense<0.000000e+00> : vector<16x64xf32>
    %63 = tpu.matmul %61, %62, %cst_26 {dimension_numbers = #tpu.dot_dimension_numbers<[1], [0], [0], [1], [0, 0, 1, 1], [], []>} : vector<16x64xbf16>, vector<64x64xbf16>, vector<16x64xf32> -> vector<16x64xf32>
    %c6 = arith.constant 6 : index
    %c0_27 = arith.constant 0 : index
    %64 = vector.load %arg2[%c6, %c0_27] : memref<16x64xf32, #tpu.memory_space<vmem>>, vector<1x64xf32>
    %65 = vector.broadcast %64 : vector<1x64xf32> to vector<16x64xf32>
    %66 = arith.addf %63, %65 : vector<16x64xf32>
    %c7 = arith.constant 7 : index
    %c0_28 = arith.constant 0 : index
    %67 = vector.load %arg2[%c7, %c0_28] : memref<16x64xf32, #tpu.memory_space<vmem>>, vector<1x64xf32>
    %c8 = arith.constant 8 : index
    %c0_29 = arith.constant 0 : index
    %68 = vector.load %arg2[%c8, %c0_29] : memref<16x64xf32, #tpu.memory_space<vmem>>, vector<1x64xf32>
    %cst_30 = arith.constant dense<0.000000e+00> : vector<16xf32>
    %69 = vector.multi_reduction <add>, %66, %cst_30 [1] : vector<16x64xf32> to vector<16xf32>
    %70 = vector.shape_cast %69 : vector<16xf32> to vector<16x1xf32>
    %cst_31 = arith.constant 6.400000e+01 : f32
    %71 = vector.broadcast %cst_31 : f32 to vector<16x1xf32>
    %72 = arith.divf %70, %71 : vector<16x1xf32>
    %73 = vector.broadcast %72 : vector<16x1xf32> to vector<16x64xf32>
    %74 = arith.subf %66, %73 : vector<16x64xf32>
    %75 = arith.mulf %74, %74 : vector<16x64xf32>
    %cst_32 = arith.constant dense<0.000000e+00> : vector<16xf32>
    %76 = vector.multi_reduction <add>, %75, %cst_32 [1] : vector<16x64xf32> to vector<16xf32>
    %77 = vector.shape_cast %76 : vector<16xf32> to vector<16x1xf32>
    %cst_33 = arith.constant 6.400000e+01 : f32
    %78 = vector.broadcast %cst_33 : f32 to vector<16x1xf32>
    %79 = arith.divf %77, %78 : vector<16x1xf32>
    %80 = vector.broadcast %72 : vector<16x1xf32> to vector<16x64xf32>
    %81 = arith.subf %66, %80 : vector<16x64xf32>
    %cst_34 = arith.constant 9.99999974E-6 : f32
    %82 = vector.broadcast %cst_34 : f32 to vector<16x1xf32>
    %83 = arith.addf %79, %82 : vector<16x1xf32>
    %84 = math.rsqrt %83 : vector<16x1xf32>
    %85 = vector.broadcast %84 : vector<16x1xf32> to vector<16x64xf32>
    %86 = arith.mulf %81, %85 : vector<16x64xf32>
    %87 = vector.broadcast %67 : vector<1x64xf32> to vector<16x64xf32>
    %88 = arith.mulf %86, %87 : vector<16x64xf32>
    %89 = vector.broadcast %68 : vector<1x64xf32> to vector<16x64xf32>
    %90 = arith.addf %88, %89 : vector<16x64xf32>
    %cst_35 = arith.constant 0.000000e+00 : f32
    %91 = vector.broadcast %cst_35 : f32 to vector<16x64xf32>
    %92 = arith.cmpf ogt, %90, %91 : vector<16x64xf32>
    %cst_36 = arith.constant 0.00999999977 : f32
    %93 = vector.broadcast %cst_36 : f32 to vector<16x64xf32>
    %94 = arith.mulf %93, %90 : vector<16x64xf32>
    %95 = arith.select %92, %90, %94 : vector<16x64xi1>, vector<16x64xf32>
    %96 = arith.truncf %95 : vector<16x64xf32> to vector<16x64xbf16>
    %c0_37 = arith.constant 0 : index
    %c0_38 = arith.constant 0 : index
    %97 = vector.load %arg5[%c0_37, %c0_38] : memref<64x1536xbf16, #tpu.memory_space<vmem>>, vector<64x768xbf16>
    %c0_39 = arith.constant 0 : index
    %c0_40 = arith.constant 0 : index
    %98 = vector.load %arg6[%c0_39, %c0_40] : memref<1x1536xf32, #tpu.memory_space<vmem>>, vector<1x768xf32>
    %cst_41 = arith.constant dense<0.000000e+00> : vector<16x768xf32>
    %99 = tpu.matmul %96, %97, %cst_41 {dimension_numbers = #tpu.dot_dimension_numbers<[1], [0], [0], [1], [0, 0, 1, 1], [], []>} : vector<16x64xbf16>, vector<64x768xbf16>, vector<16x768xf32> -> vector<16x768xf32>
    %100 = vector.broadcast %98 : vector<1x768xf32> to vector<16x768xf32>
    %101 = arith.addf %99, %100 : vector<16x768xf32>
    %c0_42 = arith.constant 0 : index
    %c0_43 = arith.constant 0 : index
    %c0_44 = arith.constant 0 : index
    %102 = vector.load %arg7[%c0_42, %c0_43, %c0_44] : memref<2x16x768xf32, #tpu.memory_space<vmem>>, vector<1x16x768xf32>
    %103 = vector.shape_cast %102 : vector<1x16x768xf32> to vector<16x768xf32>
    %104 = vector.shape_cast %101 : vector<16x768xf32> to vector<1x16x768xf32>
    tpu.vector_store %arg7[%c0_42, %c0_43, %c0_44], %104 {strides = array<i32>} : memref<2x16x768xf32, #tpu.memory_space<vmem>>, vector<1x16x768xf32>,
    %c0_45 = arith.constant 0 : index
    %c768 = arith.constant 768 : index
    %105 = vector.load %arg5[%c0_45, %c768] : memref<64x1536xbf16, #tpu.memory_space<vmem>>, vector<64x768xbf16>
    %c0_46 = arith.constant 0 : index
    %c768_47 = arith.constant 768 : index
    %106 = vector.load %arg6[%c0_46, %c768_47] : memref<1x1536xf32, #tpu.memory_space<vmem>>, vector<1x768xf32>
    %cst_48 = arith.constant dense<0.000000e+00> : vector<16x768xf32>
    %107 = tpu.matmul %96, %105, %cst_48 {dimension_numbers = #tpu.dot_dimension_numbers<[1], [0], [0], [1], [0, 0, 1, 1], [], []>} : vector<16x64xbf16>, vector<64x768xbf16>, vector<16x768xf32> -> vector<16x768xf32>
    %108 = vector.broadcast %106 : vector<1x768xf32> to vector<16x768xf32>
    %109 = arith.addf %107, %108 : vector<16x768xf32>
    %c1_49 = arith.constant 1 : index
    %c0_50 = arith.constant 0 : index
    %c0_51 = arith.constant 0 : index
    %110 = vector.load %arg7[%c1_49, %c0_50, %c0_51] : memref<2x16x768xf32, #tpu.memory_space<vmem>>, vector<1x16x768xf32>
    %111 = vector.shape_cast %110 : vector<1x16x768xf32> to vector<16x768xf32>
    %112 = vector.shape_cast %109 : vector<16x768xf32> to vector<1x16x768xf32>
    tpu.vector_store %arg7[%c1_49, %c0_50, %c0_51], %112 {strides = array<i32>} : memref<2x16x768xf32, #tpu.memory_space<vmem>>, vector<1x16x768xf32>,
    return
  }
  func.func @transform_0(%arg0: i32) -> (i32, i32) {
    %c0_i32 = arith.constant 0 : i32
    %c0_i32_0 = arith.constant 0 : i32
    %c0_i32_1 = arith.constant 0 : i32
    return %c0_i32, %c0_i32_0 : i32, i32
  }
  func.func @transform_1(%arg0: i32) -> (i32, i32) {
    %c0_i32 = arith.constant 0 : i32
    %c0_i32_0 = arith.constant 0 : i32
    %c0_i32_1 = arith.constant 0 : i32
    return %c0_i32, %c0_i32_0 : i32, i32
  }
  func.func @transform_2(%arg0: i32) -> (i32, i32) {
    %c0_i32 = arith.constant 0 : i32
    %c0_i32_0 = arith.constant 0 : i32
    %c0_i32_1 = arith.constant 0 : i32
    return %c0_i32, %c0_i32_0 : i32, i32
  }
  func.func @transform_3(%arg0: i32) -> (i32, i32) {
    %c0_i32 = arith.constant 0 : i32
    %c0_i32_0 = arith.constant 0 : i32
    %c0_i32_1 = arith.constant 0 : i32
    return %c0_i32, %c0_i32_0 : i32, i32
  }
  func.func @transform_4(%arg0: i32) -> (i32, i32) {
    %c0_i32 = arith.constant 0 : i32
    %c0_i32_0 = arith.constant 0 : i32
    return %c0_i32, %arg0 : i32, i32
  }
  func.func @transform_5(%arg0: i32) -> (i32, i32) {
    %c0_i32 = arith.constant 0 : i32
    %c0_i32_0 = arith.constant 0 : i32
    return %c0_i32, %arg0 : i32, i32
  }
  func.func @transform_6(%arg0: i32) -> (i32, i32, i32) {
    %c0_i32 = arith.constant 0 : i32
    %c0_i32_0 = arith.constant 0 : i32
    %c0_i32_1 = arith.constant 0 : i32
    return %arg0, %c0_i32, %c0_i32_0 : i32, i32, i32
  }
}

</mosaic_0001>

<llo_original>
// kernel: neti_mapper_forward.1
$region0: #{neti_mapper_forward.1}
  #allocation0 [shape = 'u32[]', space=smem, size = 0x4, offset = 0x4, fixed_abs, tag = 'smem constant byte address 0x4 - core index']
  #allocation1 [shape = 'u32[144,128]{1,0:T(1,128)}', space=vmem, size = 0x12000, scoped, tag = 'internal scratch']
  %s0 = inlined_call_operand.vmem [shape: f32[16,3], index: 0, kind: input, shape index: {}]
  %s1 = inlined_call_operand.vmem [shape: f32[16,64], index: 1, kind: input, shape index: {}]
  %s2 = inlined_call_operand.vmem [shape: bf16[64,64], index: 2, kind: input, shape index: {}]
  %s3 = inlined_call_operand.vmem [shape: bf16[64,64], index: 3, kind: input, shape index: {}]
  %s4 = inlined_call_operand.hbm [shape: bf16[64,1536], index: 4, kind: input, shape index: {}]
  %s5 = inlined_call_operand.vmem [shape: f32[1,1536], index: 5, kind: input, shape index: {}]
  %s6 = inlined_call_operand.vmem [shape: f32[2,16,768], index: 6, kind: output, shape index: {}]
  %s7 = sld [smem:[#allocation0]]
  $region38: #{neti_mapper_forward.1} parent=0
    _
  %s9 = ssub.s32 1, %s7
  %s10 = scalar_select 0, %s9, %s7
  $region1: #{neti_mapper_forward.1} parent=0
    #allocation2 [shape = 'u8[196608]{0}', space=vmem, size = 0x30000, scoped, tag = 'input window, operand 4, single buffered']
    #allocation3 [shape = 's32[1]{0}', space=sflag, size = 0x4, scoped, tag = 'scoped memory for neti_mapper_forward.1']
    %11 = vsyncpa [#allocation3], 0
    // Predicated region
    $region2: #{neti_mapper_forward.1} parent=1 // pred_check
      _
    $region3: #{neti_mapper_forward.1} parent=1 // pred_check_branch
      %13 = sbr.rel (0) target = $region5
    $region4: #{neti_mapper_forward.1} parent=1 // pred_region
      _
    $region5: #{neti_mapper_forward.1} parent=1 // pred_fallthru
      _
    // Predicated region
    $region6: #{neti_mapper_forward.1} parent=1 // pred_check
      _
    $region7: #{neti_mapper_forward.1} parent=1 // pred_check_branch
      %15 = sbr.rel (0) target = $region9
    $region8: #{neti_mapper_forward.1} parent=1 // pred_region
      _
    $region9: #{neti_mapper_forward.1} parent=1 // pred_fallthru
      _
    // Predicated region
    $region10: #{neti_mapper_forward.1} parent=1 // pred_check
      _
    $region11: #{neti_mapper_forward.1} parent=1 // pred_check_branch
      %17 = sbr.rel (0) target = $region13
    $region12: #{neti_mapper_forward.1} parent=1 // pred_region
      _
    $region13: #{neti_mapper_forward.1} parent=1 // pred_fallthru
      _
    // Predicated region
    $region14: #{neti_mapper_forward.1} parent=1 // pred_check
      _
    $region15: #{neti_mapper_forward.1} parent=1 // pred_check_branch
      %19 = sbr.rel (0) target = $region17
    $region16: #{neti_mapper_forward.1} parent=1 // pred_region
      _
    $region17: #{neti_mapper_forward.1} parent=1 // pred_fallthru
      _
    // Predicated region
    $region18: #{neti_mapper_forward.1} parent=1 // pred_check
      _
    $region19: #{neti_mapper_forward.1} parent=1 // pred_check_branch
      %21 = sbr.rel (0) target = $region21
    $region20: #{neti_mapper_forward.1} parent=1 // pred_region
      %s23 = ssub.s32 6144, 6144
      %24 = vsyncadd [#allocation3], %s23
      %s25 = sshll.u32 [#allocation2], 4
      %s26 = int_to_ptr.vmem [resolvable:$true] %s25
      %31 = dma.hbm_to_vmem [thread:$0]  %s4, 6144, %s26, [#allocation3], 768, 768, 48
    $region21: #{neti_mapper_forward.1} parent=1 // pred_fallthru
      _
    // Predicated region
    $region22: #{neti_mapper_forward.1} parent=1 // pred_check
      _
    $region23: #{neti_mapper_forward.1} parent=1 // pred_check_branch
      %33 = sbr.rel (0) target = $region25
    $region24: #{neti_mapper_forward.1} parent=1 // pred_region
      _
    $region25: #{neti_mapper_forward.1} parent=1 // pred_fallthru
      _
    // Predicated region
    $region26: #{neti_mapper_forward.1} parent=1 // pred_check
      _
    $region27: #{neti_mapper_forward.1} parent=1 // pred_check_branch
      %35 = sbr.rel (0) target = $region29
    $region28: #{neti_mapper_forward.1} parent=1 // pred_region
      %36 = dma.done [#allocation3], 6144
    $region29: #{neti_mapper_forward.1} parent=1 // pred_fallthru
      _
    %v38 = vld [vmem:[%s0] sm:$0xff]
    %v39 = vld [vmem:[%s0 + $0x8] sm:$0xff]
    %v40 = vld [vmem:[%s1] sm:$0x1]
    %v41 = vld [vmem:[%s1 + $0x1] sm:$0x1]
    %v42 = vld [vmem:[%s1 + $0x2] sm:$0x1]
    %v43 = vld [vmem:[%s1 + $0x9] sm:$0x1]
    %45 = vset.pattern.permute.xlu0 0
    %46 = vperm.xlu0 %45, %v38
    %v47 = vpop.permute.xlu0 %46
    %50 = vset.pattern.permute.xlu0 0
    %51 = vperm.xlu0 %50, %v39
    %v52 = vpop.permute.xlu0 %51
    %v54 = vlaneseq
    %v55 = vshrl.u32 %v54, 7
    %v56 = vsub.s32 0, %v55
    %v57 = vrot.slane %v40, %v56
    %v58 = vmul.f32 %v47, %v57
    %v59 = vmul.f32 %v52, %v57
    %60 = vset.pattern.permute.xlu0 1
    %61 = vperm.xlu0 %60, %v38
    %v62 = vpop.permute.xlu0 %61
    %64 = vset.pattern.permute.xlu0 1
    %65 = vperm.xlu0 %64, %v39
    %v66 = vpop.permute.xlu0 %65
    %v68 = vlaneseq
    %v69 = vshrl.u32 %v68, 7
    %v70 = vsub.s32 0, %v69
    %v71 = vrot.slane %v41, %v70
    %v72 = vmul.f32 %v62, %v71
    %v73 = vmul.f32 %v66, %v71
    %v74 = vadd.f32 %v58, %v72
    %v75 = vadd.f32 %v59, %v73
    %76 = vset.pattern.permute.xlu0 2
    %77 = vperm.xlu0 %76, %v38
    %v78 = vpop.permute.xlu0 %77
    %80 = vset.pattern.permute.xlu0 2
    %81 = vperm.xlu0 %80, %v39
    %v82 = vpop.permute.xlu0 %81
    %v84 = vlaneseq
    %v85 = vshrl.u32 %v84, 7
    %v86 = vsub.s32 0, %v85
    %v87 = vrot.slane %v42, %v86
    %v88 = vmul.f32 %v78, %v87
    %v89 = vmul.f32 %v82, %v87
    %v90 = vadd.f32 %v74, %v88
    %v91 = vadd.f32 %v75, %v89
    %v92 = vlaneseq
    %v93 = vshrl.u32 %v92, 7
    %v94 = vsub.s32 0, %v93
    %v95 = vrot.slane %v43, %v94
    %v96 = vadd.f32 %v90, %v95
    %v97 = vadd.f32 %v91, %v95
    %v98 = vand.u32 2147483647, %v96
    %vm99 = vcmp.le.f32.partialorder %v98, 0.7853982
    %vm100 = vcmp.lt.s32.totalorder %v96, 0
    %v101 = vand.u32 %v96, 2139095040
    %v102 = vshrl.u32 %v101, 23
    %v103 = vsub.s32 %v102, 127
    %v104 = vand.u32 2147483647, %v96
    %v105 = vand.u32 %v104, 8388607
    %v106 = vor.u32 %v105, 8388608
    %v107 = vsub.s32 0, %v106
    %v108 = vadd.s32 %v103, 1
    %vm109 = vcmp.gt.s32.totalorder %v108, 0
    %v110 = vsel %vm109, %v108, 0
    %v111 = vshrl.u32 %v110, 5
    %v112 = vand.u32 %v110, 31
    %v113 = vsub.s32 32, %v112
    %v114 = vshrl.u32 683565275, %v113
    %v115 = vshll.u32 683565275, %v112
    %v116 = vshrl.u32 2475754826, %v113
    %v117 = vor.u32 %v115, %v116
    %v118 = vshll.u32 2475754826, %v112
    %v119 = vshrl.u32 2131351028, %v113
    %v120 = vor.u32 %v118, %v119
    %v121 = vshll.u32 2131351028, %v112
    %v122 = vshrl.u32 2102212464, %v113
    %v123 = vor.u32 %v121, %v122
    %v124 = vshll.u32 2102212464, %v112
    %v125 = vshrl.u32 920167782, %v113
    %v126 = vor.u32 %v124, %v125
    %v127 = vshll.u32 920167782, %v112
    %v128 = vshrl.u32 1326507024, %v113
    %v129 = vor.u32 %v127, %v128
    %vm130 = vcmp.lt.s32.totalorder %v111, 1
    %vm131 = vcmp.lt.s32.totalorder %v111, 2
    %vm132 = vcmp.lt.s32.totalorder %v111, 3
    %vm133 = vcmp.lt.s32.totalorder %v111, 4
    %v134 = vsel %vm130, %v114, %v117
    %v135 = vsel %vm133, %v123, 2102212464
    %v136 = vsel %vm132, %v120, %v135
    %v137 = vsel %vm131, %v134, %v136
    %v138 = vsel %vm130, %v117, %v120
    %v139 = vsel %vm133, %v126, 920167782
    %v140 = vsel %vm132, %v123, %v139
    %v141 = vsel %vm131, %v138, %v140
    %v142 = vsel %vm130, %v120, %v123
    %v143 = vsel %vm133, %v129, 1326507024
    %v144 = vsel %vm132, %v126, %v143
    %v145 = vsel %vm131, %v142, %v144
    %v146 = vshll.u32 %v106, 8
    %v147 = vmul.u32.u64.compose %v146, %v145
    %v148 = vextract.low.u32 %v147
    %v149 = vextract.high.u32 %v147
    %v150 = vmul.u32.u64.compose %v146, %v141
    %v151 = vextract.low.u32 %v150
    %v152 = vextract.high.u32 %v150
    %v153 = vmul.u32 %v146, %v137
    %v154 = vadd.s32 %v149, %v151
    %vm155 = vc.u32 %v149, %v151
    %v156 = vadd.s32 %v152, 1
    %v157 = vsel %vm155, %v156, %v152
    %v158 = vadd.s32 %v153, %v157
    %v159 = vadd.s32 %v158, 536870912
    %v160 = vshrl.u32 %v159, 30
    %v161 = vshll.u32 %v160, 30
    %v162 = vsub.s32 %v158, %v161
    %vm163 = vcmp.lt.s32.totalorder %v162, 0
    %v164 = vsub.s32 0, %v162
    %v165 = vsel %vm163, %v164, %v162
    %v166 = vclz %v165
    %v167 = vsub.s32 %v166, 2
    %vm168 = vcmp.gt.s32.totalorder 0, %v167
    %v169 = vsel %vm168, 0, %v167
    %v170 = vsub.s32 32, %v169
    %v171 = vshll.u32 %v162, %v169
    %v172 = vshrl.u32 %v154, %v170
    %v173 = vor.u32 %v171, %v172
    %v174 = vsub.s32 4294967266, %v169
    %v175 = vadd.s32 %v174, 127
    %v176 = vshll.u32 %v175, 23
    %v177 = vor.u32 4788187, %v176
    %v178 = vand.u32 2147483647, %v177
    %v180 = vcvt.s32.f32 %v173
    %v181 = vmul.f32 %v180, %v178
    %v182 = vxor.u32 %v181, 2147483648
    %v183 = vsel %vm100, %v182, %v181
    %v184 = vsub.s32 4, %v160
    %v185 = vsel %vm100, %v184, %v160
    %v186 = vsel %vm99, %v96, %v183
    %v187 = vsel %vm99, 0, %v185
    %v188 = vcosq.f32.pop %v186
    %v189 = vsinq.f32.pop %v186
    %vm190 = vweird.f32 %v96
    %v191 = vadd.s32 %v187, 3
    %v192 = vand.u32 %v191, 3
    %vm193 = vcmp.lt.s32.totalorder %v192, 2
    %vm194 = vcmp.eq.s32.totalorder %v192, 0
    %v195 = vxor.u32 %v189, 2147483648
    %v196 = vsel %vm194, %v188, %v195
    %vm197 = vcmp.eq.s32.totalorder %v192, 2
    %v198 = vxor.u32 %v188, 2147483648
    %v199 = vsel %vm197, %v198, %v189
    %v200 = vsel %vm193, %v196, %v199
    %v201 = vsel %vm190, nan, %v200
    %v202 = vand.u32 2147483647, %v97
    %vm203 = vcmp.le.f32.partialorder %v202, 0.7853982
    %vm204 = vcmp.lt.s32.totalorder %v97, 0
    %v205 = vand.u32 %v97, 2139095040
    %v206 = vshrl.u32 %v205, 23
    %v207 = vsub.s32 %v206, 127
    %v208 = vand.u32 2147483647, %v97
    %v209 = vand.u32 %v208, 8388607
    %v210 = vor.u32 %v209, 8388608
    %v211 = vsub.s32 0, %v210
    %v212 = vadd.s32 %v207, 1
    %vm213 = vcmp.gt.s32.totalorder %v212, 0
    %v214 = vsel %vm213, %v212, 0
    %v215 = vshrl.u32 %v214, 5
    %v216 = vand.u32 %v214, 31
    %v217 = vsub.s32 32, %v216
    %v218 = vshrl.u32 683565275, %v217
    %v219 = vshll.u32 683565275, %v216
    %v220 = vshrl.u32 2475754826, %v217
    %v221 = vor.u32 %v219, %v220
    %v222 = vshll.u32 2475754826, %v216
    %v223 = vshrl.u32 2131351028, %v217
    %v224 = vor.u32 %v222, %v223
    %v225 = vshll.u32 2131351028, %v216
    %v226 = vshrl.u32 2102212464, %v217
    %v227 = vor.u32 %v225, %v226
    %v228 = vshll.u32 2102212464, %v216
    %v229 = vshrl.u32 920167782, %v217
    %v230 = vor.u32 %v228, %v229
    %v231 = vshll.u32 920167782, %v216
    %v232 = vshrl.u32 1326507024, %v217
    %v233 = vor.u32 %v231, %v232
    %vm234 = vcmp.lt.s32.totalorder %v215, 1
    %vm235 = vcmp.lt.s32.totalorder %v215, 2
    %vm236 = vcmp.lt.s32.totalorder %v215, 3
    %vm237 = vcmp.lt.s32.totalorder %v215, 4
    %v238 = vsel %vm234, %v218, %v221
    %v239 = vsel %vm237, %v227, 2102212464
    %v240 = vsel %vm236, %v224, %v239
    %v241 = vsel %vm235, %v238, %v240
    %v242 = vsel %vm234, %v221, %v224
    %v243 = vsel %vm237, %v230, 920167782
    %v244 = vsel %vm236, %v227, %v243
    %v245 = vsel %vm235, %v242, %v244
    %v246 = vsel %vm234, %v224, %v227
    %v247 = vsel %vm237, %v233, 1326507024
    %v248 = vsel %vm236, %v230, %v247
    %v249 = vsel %vm235, %v246, %v248
    %v250 = vshll.u32 %v210, 8
    %v251 = vmul.u32.u64.compose %v250, %v249
    %v252 = vextract.low.u32 %v251
    %v253 = vextract.high.u32 %v251
    %v254 = vmul.u32.u64.compose %v250, %v245
    %v255 = vextract.low.u32 %v254
    %v256 = vextract.high.u32 %v254
    %v257 = vmul.u32 %v250, %v241
    %v258 = vadd.s32 %v253, %v255
    %vm259 = vc.u32 %v253, %v255
    %v260 = vadd.s32 %v256, 1
    %v261 = vsel %vm259, %v260, %v256
    %v262 = vadd.s32 %v257, %v261
    %v263 = vadd.s32 %v262, 536870912
    %v264 = vshrl.u32 %v263, 30
    %v265 = vshll.u32 %v264, 30
    %v266 = vsub.s32 %v262, %v265
    %vm267 = vcmp.lt.s32.totalorder %v266, 0
    %v268 = vsub.s32 0, %v266
    %v269 = vsel %vm267, %v268, %v266
    %v270 = vclz %v269
    %v271 = vsub.s32 %v270, 2
    %vm272 = vcmp.gt.s32.totalorder 0, %v271
    %v273 = vsel %vm272, 0, %v271
    %v274 = vsub.s32 32, %v273
    %v275 = vshll.u32 %v266, %v273
    %v276 = vshrl.u32 %v258, %v274
    %v277 = vor.u32 %v275, %v276
    %v278 = vsub.s32 4294967266, %v273
    %v279 = vadd.s32 %v278, 127
    %v280 = vshll.u32 %v279, 23
    %v281 = vor.u32 4788187, %v280
    %v282 = vand.u32 2147483647, %v281
    %v284 = vcvt.s32.f32 %v277
    %v285 = vmul.f32 %v284, %v282
    %v286 = vxor.u32 %v285, 2147483648
    %v287 = vsel %vm204, %v286, %v285
    %v288 = vsub.s32 4, %v264
    %v289 = vsel %vm204, %v288, %v264
    %v290 = vsel %vm203, %v97, %v287
    %v291 = vsel %vm203, 0, %v289
    %v292 = vcosq.f32.pop %v290
    %v293 = vsinq.f32.pop %v290
    %vm294 = vweird.f32 %v97
    %v295 = vadd.s32 %v291, 3
    %v296 = vand.u32 %v295, 3
    %vm297 = vcmp.lt.s32.totalorder %v296, 2
    %vm298 = vcmp.eq.s32.totalorder %v296, 0
    %v299 = vxor.u32 %v293, 2147483648
    %v300 = vsel %vm298, %v292, %v299
    %vm301 = vcmp.eq.s32.totalorder %v296, 2
    %v302 = vxor.u32 %v292, 2147483648
    %v303 = vsel %vm301, %v302, %v293
    %v304 = vsel %vm297, %v300, %v303
    %v305 = vsel %vm294, nan, %v304
    %v306 = vpack.c.bf16 %v305, %v201
    %v307 = vand.u32 2147483647, %v96
    %vm308 = vcmp.le.f32.partialorder %v307, 0.7853982
    %vm309 = vcmp.lt.s32.totalorder %v96, 0
    %v310 = vand.u32 %v96, 2139095040
    %v311 = vshrl.u32 %v310, 23
    %v312 = vsub.s32 %v311, 127
    %v313 = vand.u32 2147483647, %v96
    %v314 = vand.u32 %v313, 8388607
    %v315 = vor.u32 %v314, 8388608
    %v316 = vsub.s32 0, %v315
    %v317 = vadd.s32 %v312, 1
    %vm318 = vcmp.gt.s32.totalorder %v317, 0
    %v319 = vsel %vm318, %v317, 0
    %v320 = vshrl.u32 %v319, 5
    %v321 = vand.u32 %v319, 31
    %v322 = vsub.s32 32, %v321
    %v323 = vshrl.u32 683565275, %v322
    %v324 = vshll.u32 683565275, %v321
    %v325 = vshrl.u32 2475754826, %v322
    %v326 = vor.u32 %v324, %v325
    %v327 = vshll.u32 2475754826, %v321
    %v328 = vshrl.u32 2131351028, %v322
    %v329 = vor.u32 %v327, %v328
    %v330 = vshll.u32 2131351028, %v321
    %v331 = vshrl.u32 2102212464, %v322
    %v332 = vor.u32 %v330, %v331
    %v333 = vshll.u32 2102212464, %v321
    %v334 = vshrl.u32 920167782, %v322
    %v335 = vor.u32 %v333, %v334
    %v336 = vshll.u32 920167782, %v321
    %v337 = vshrl.u32 1326507024, %v322
    %v338 = vor.u32 %v336, %v337
    %vm339 = vcmp.lt.s32.totalorder %v320, 1
    %vm340 = vcmp.lt.s32.totalorder %v320, 2
    %vm341 = vcmp.lt.s32.totalorder %v320, 3
    %vm342 = vcmp.lt.s32.totalorder %v320, 4
    %v343 = vsel %vm339, %v323, %v326
    %v344 = vsel %vm342, %v332, 2102212464
    %v345 = vsel %vm341, %v329, %v344
    %v346 = vsel %vm340, %v343, %v345
    %v347 = vsel %vm339, %v326, %v329
    %v348 = vsel %vm342, %v335, 920167782
    %v349 = vsel %vm341, %v332, %v348
    %v350 = vsel %vm340, %v347, %v349
    %v351 = vsel %vm339, %v329, %v332
    %v352 = vsel %vm342, %v338, 1326507024
    %v353 = vsel %vm341, %v335, %v352
    %v354 = vsel %vm340, %v351, %v353
    %v355 = vshll.u32 %v315, 8
    %v356 = vmul.u32.u64.compose %v355, %v354
    %v357 = vextract.low.u32 %v356
    %v358 = vextract.high.u32 %v356
    %v359 = vmul.u32.u64.compose %v355, %v350
    %v360 = vextract.low.u32 %v359
    %v361 = vextract.high.u32 %v359
    %v362 = vmul.u32 %v355, %v346
    %v363 = vadd.s32 %v358, %v360
    %vm364 = vc.u32 %v358, %v360
    %v365 = vadd.s32 %v361, 1
    %v366 = vsel %vm364, %v365, %v361
    %v367 = vadd.s32 %v362, %v366
    %v368 = vadd.s32 %v367, 536870912
    %v369 = vshrl.u32 %v368, 30
    %v370 = vshll.u32 %v369, 30
    %v371 = vsub.s32 %v367, %v370
    %vm372 = vcmp.lt.s32.totalorder %v371, 0
    %v373 = vsub.s32 0, %v371
    %v374 = vsel %vm372, %v373, %v371
    %v375 = vclz %v374
    %v376 = vsub.s32 %v375, 2
    %vm377 = vcmp.gt.s32.totalorder 0, %v376
    %v378 = vsel %vm377, 0, %v376
    %v379 = vsub.s32 32, %v378
    %v380 = vshll.u32 %v371, %v378
    %v381 = vshrl.u32 %v363, %v379
    %v382 = vor.u32 %v380, %v381
    %v383 = vsub.s32 4294967266, %v378
    %v384 = vadd.s32 %v383, 127
    %v385 = vshll.u32 %v384, 23
    %v386 = vor.u32 4788187, %v385
    %v387 = vand.u32 2147483647, %v386
    %v389 = vcvt.s32.f32 %v382
    %v390 = vmul.f32 %v389, %v387
    %v391 = vxor.u32 %v390, 2147483648
    %v392 = vsel %vm309, %v391, %v390
    %v393 = vsub.s32 4, %v369
    %v394 = vsel %vm309, %v393, %v369
    %v395 = vsel %vm308, %v96, %v392
    %v396 = vsel %vm308, 0, %v394
    %v397 = vcosq.f32.pop %v395
    %v398 = vsinq.f32.pop %v395
    %vm399 = vweird.f32 %v96
    %v400 = vand.u32 %v396, 3
    %vm401 = vcmp.lt.s32.totalorder %v400, 2
    %vm402 = vcmp.eq.s32.totalorder %v400, 0
    %v403 = vxor.u32 %v398, 2147483648
    %v404 = vsel %vm402, %v397, %v403
    %vm405 = vcmp.eq.s32.totalorder %v400, 2
    %v406 = vxor.u32 %v397, 2147483648
    %v407 = vsel %vm405, %v406, %v398
    %v408 = vsel %vm401, %v404, %v407
    %v409 = vsel %vm399, nan, %v408
    %v410 = vand.u32 2147483647, %v97
    %vm411 = vcmp.le.f32.partialorder %v410, 0.7853982
    %vm412 = vcmp.lt.s32.totalorder %v97, 0
    %v413 = vand.u32 %v97, 2139095040
    %v414 = vshrl.u32 %v413, 23
    %v415 = vsub.s32 %v414, 127
    %v416 = vand.u32 2147483647, %v97
    %v417 = vand.u32 %v416, 8388607
    %v418 = vor.u32 %v417, 8388608
    %v419 = vsub.s32 0, %v418
    %v420 = vadd.s32 %v415, 1
    %vm421 = vcmp.gt.s32.totalorder %v420, 0
    %v422 = vsel %vm421, %v420, 0
    %v423 = vshrl.u32 %v422, 5
    %v424 = vand.u32 %v422, 31
    %v425 = vsub.s32 32, %v424
    %v426 = vshrl.u32 683565275, %v425
    %v427 = vshll.u32 683565275, %v424
    %v428 = vshrl.u32 2475754826, %v425
    %v429 = vor.u32 %v427, %v428
    %v430 = vshll.u32 2475754826, %v424
    %v431 = vshrl.u32 2131351028, %v425
    %v432 = vor.u32 %v430, %v431
    %v433 = vshll.u32 2131351028, %v424
    %v434 = vshrl.u32 2102212464, %v425
    %v435 = vor.u32 %v433, %v434
    %v436 = vshll.u32 2102212464, %v424
    %v437 = vshrl.u32 920167782, %v425
    %v438 = vor.u32 %v436, %v437
    %v439 = vshll.u32 920167782, %v424
    %v440 = vshrl.u32 1326507024, %v425
    %v441 = vor.u32 %v439, %v440
    %vm442 = vcmp.lt.s32.totalorder %v423, 1
    %vm443 = vcmp.lt.s32.totalorder %v423, 2
    %vm444 = vcmp.lt.s32.totalorder %v423, 3
    %vm445 = vcmp.lt.s32.totalorder %v423, 4
    %v446 = vsel %vm442, %v426, %v429
    %v447 = vsel %vm445, %v435, 2102212464
    %v448 = vsel %vm444, %v432, %v447
    %v449 = vsel %vm443, %v446, %v448
    %v450 = vsel %vm442, %v429, %v432
    %v451 = vsel %vm445, %v438, 920167782
    %v452 = vsel %vm444, %v435, %v451
    %v453 = vsel %vm443, %v450, %v452
    %v454 = vsel %vm442, %v432, %v435
    %v455 = vsel %vm445, %v441, 1326507024
    %v456 = vsel %vm444, %v438, %v455
    %v457 = vsel %vm443, %v454, %v456
    %v458 = vshll.u32 %v418, 8
    %v459 = vmul.u32.u64.compose %v458, %v457
    %v460 = vextract.low.u32 %v459
    %v461 = vextract.high.u32 %v459
    %v462 = vmul.u32.u64.compose %v458, %v453
    %v463 = vextract.low.u32 %v462
    %v464 = vextract.high.u32 %v462
    %v465 = vmul.u32 %v458, %v449
    %v466 = vadd.s32 %v461, %v463
    %vm467 = vc.u32 %v461, %v463
    %v468 = vadd.s32 %v464, 1
    %v469 = vsel %vm467, %v468, %v464
    %v470 = vadd.s32 %v465, %v469
    %v471 = vadd.s32 %v470, 536870912
    %v472 = vshrl.u32 %v471, 30
    %v473 = vshll.u32 %v472, 30
    %v474 = vsub.s32 %v470, %v473
    %vm475 = vcmp.lt.s32.totalorder %v474, 0
    %v476 = vsub.s32 0, %v474
    %v477 = vsel %vm475, %v476, %v474
    %v478 = vclz %v477
    %v479 = vsub.s32 %v478, 2
    %vm480 = vcmp.gt.s32.totalorder 0, %v479
    %v481 = vsel %vm480, 0, %v479
    %v482 = vsub.s32 32, %v481
    %v483 = vshll.u32 %v474, %v481
    %v484 = vshrl.u32 %v466, %v482
    %v485 = vor.u32 %v483, %v484
    %v486 = vsub.s32 4294967266, %v481
    %v487 = vadd.s32 %v486, 127
    %v488 = vshll.u32 %v487, 23
    %v489 = vor.u32 4788187, %v488
    %v490 = vand.u32 2147483647, %v489
    %v492 = vcvt.s32.f32 %v485
    %v493 = vmul.f32 %v492, %v490
    %v494 = vxor.u32 %v493, 2147483648
    %v495 = vsel %vm412, %v494, %v493
    %v496 = vsub.s32 4, %v472
    %v497 = vsel %vm412, %v496, %v472
    %v498 = vsel %vm411, %v97, %v495
    %v499 = vsel %vm411, 0, %v497
    %v500 = vcosq.f32.pop %v498
    %v501 = vsinq.f32.pop %v498
    %vm502 = vweird.f32 %v97
    %v503 = vand.u32 %v499, 3
    %vm504 = vcmp.lt.s32.totalorder %v503, 2
    %vm505 = vcmp.eq.s32.totalorder %v503, 0
    %v506 = vxor.u32 %v501, 2147483648
    %v507 = vsel %vm505, %v500, %v506
    %vm508 = vcmp.eq.s32.totalorder %v503, 2
    %v509 = vxor.u32 %v500, 2147483648
    %v510 = vsel %vm508, %v509, %v501
    %v511 = vsel %vm504, %v507, %v510
    %v512 = vsel %vm502, nan, %v511
    %v513 = vpack.c.bf16 %v512, %v409
    %v514 = vld [vmem:[%s2] sm:$0xf]
    %v515 = vld [vmem:[%s2 + $0x4] sm:$0xf]
    %v516 = vld [vmem:[%s2 + $0x8] sm:$0xf]
    %v517 = vld [vmem:[%s2 + $0xc] sm:$0xf]
    %v518 = vld [vmem:[%s2 + $0x10] sm:$0xf]
    %v519 = vld [vmem:[%s2 + $0x14] sm:$0xf]
    %v520 = vld [vmem:[%s2 + $0x18] sm:$0xf]
    %v521 = vld [vmem:[%s2 + $0x1c] sm:$0xf]
    %v526 = vunpack.c.l.b16 %v518
    %v527 = vunpack.c.l.b16 %v519
    %v528 = vunpack.c.l.b16 %v520
    %v529 = vunpack.c.l.b16 %v521
    %v530 = vpack.c.b16 %v527, %v526
    %v531 = vpack.c.b16 %v529, %v528
    %vm534 = vcmask 261120
    %v536 = vsel %vm534, %v513, 0
    %538 = vmatprep.subr.bf16.mxu0 0
    %539 = vmatpush1.bf16.msra.mxu0 %v530
    %540 = vmatprep.subr.bf16.mxu0 0
    %541 = vmatpush1.bf16.msra.mxu0 %v531
    %542 = vmatprep.subr.bf16.mxu0 0
    %543 = vmatpush1.bf16.msra.mxu0 0
    %544 = vmatprep.subr.bf16.mxu0 0
    %545 = vmatpush1.bf16.msra.mxu0 0
    %546 = vmatprep.subr.bf16.mxu0 0
    %547 = vmatpush1.bf16.msra.mxu0 0
    %548 = vmatprep.subr.bf16.mxu0 0
    %549 = vmatpush1.bf16.msra.mxu0 0
    %550 = vmatprep.subr.bf16.mxu0 0
    %551 = vmatpush1.bf16.msra.mxu0 0
    %552 = vmatprep.subr.bf16.mxu0 0
    %553 = vmatpush1.bf16.msra.mxu0 0
    %554 = vmatprep.subr.bf16.mxu0 0
    %555 = vmatpush1.bf16.msra.mxu0 0
    %556 = vmatprep.subr.bf16.mxu0 0
    %557 = vmatpush1.bf16.msra.mxu0 0
    %558 = vmatprep.subr.bf16.mxu0 0
    %559 = vmatpush1.bf16.msra.mxu0 0
    %560 = vmatprep.subr.bf16.mxu0 0
    %561 = vmatpush1.bf16.msra.mxu0 0
    %562 = vmatprep.subr.bf16.mxu0 0
    %563 = vmatpush1.bf16.msra.mxu0 0
    %564 = vmatprep.subr.bf16.mxu0 0
    %565 = vmatpush1.bf16.msra.mxu0 0
    %566 = vmatprep.subr.bf16.mxu0 0
    %567 = vmatpush1.bf16.msra.mxu0 0
    %568 = vmatprep.subr.bf16.mxu0 0
    %569 = vmatpush1.bf16.msra.mxu0 0
    %570 = vmatprep.mubr.bf16.mxu0 0
    %571 = vmatmul.mubr.bf16.gmra.mrb[0].mxu0 %v536
    %v572 = vpop.f32.mrb[0].mxu0
    %v573 = vadd.f32 0.0, %v572
    %v574 = vpop.f32.mrb[0].mxu0
    %v575 = vpop.f32.mrb[0].mxu0
    %v576 = vadd.f32 0.0, %v575
    %v577 = vpop.f32.mrb[0].mxu0
    %578 = vdwg.mxu0
    %v583 = vunpack.c.l.b16 %v514
    %v584 = vunpack.c.l.b16 %v515
    %v585 = vunpack.c.l.b16 %v516
    %v586 = vunpack.c.l.b16 %v517
    %v587 = vpack.c.b16 %v584, %v583
    %v588 = vpack.c.b16 %v586, %v585
    %v592 = vsel %vm534, %v306, 0
    %594 = vmatprep.subr.bf16.mxu0 0
    %595 = vmatpush1.bf16.msra.mxu0 %v587
    %596 = vmatprep.subr.bf16.mxu0 0
    %597 = vmatpush1.bf16.msra.mxu0 %v588
    %598 = vmatprep.subr.bf16.mxu0 0
    %599 = vmatpush1.bf16.msra.mxu0 0
    %600 = vmatprep.subr.bf16.mxu0 0
    %601 = vmatpush1.bf16.msra.mxu0 0
    %602 = vmatprep.subr.bf16.mxu0 0
    %603 = vmatpush1.bf16.msra.mxu0 0
    %604 = vmatprep.subr.bf16.mxu0 0
    %605 = vmatpush1.bf16.msra.mxu0 0
    %606 = vmatprep.subr.bf16.mxu0 0
    %607 = vmatpush1.bf16.msra.mxu0 0
    %608 = vmatprep.subr.bf16.mxu0 0
    %609 = vmatpush1.bf16.msra.mxu0 0
    %610 = vmatprep.subr.bf16.mxu0 0
    %611 = vmatpush1.bf16.msra.mxu0 0
    %612 = vmatprep.subr.bf16.mxu0 0
    %613 = vmatpush1.bf16.msra.mxu0 0
    %614 = vmatprep.subr.bf16.mxu0 0
    %615 = vmatpush1.bf16.msra.mxu0 0
    %616 = vmatprep.subr.bf16.mxu0 0
    %617 = vmatpush1.bf16.msra.mxu0 0
    %618 = vmatprep.subr.bf16.mxu0 0
    %619 = vmatpush1.bf16.msra.mxu0 0
    %620 = vmatprep.subr.bf16.mxu0 0
    %621 = vmatpush1.bf16.msra.mxu0 0
    %622 = vmatprep.subr.bf16.mxu0 0
    %623 = vmatpush1.bf16.msra.mxu0 0
    %624 = vmatprep.subr.bf16.mxu0 0
    %625 = vmatpush1.bf16.msra.mxu0 0
    %626 = vmatprep.mubr.bf16.mxu0 0
    %627 = vmatmul.mubr.bf16.gmra.mrb[0].mxu0 %v592
    %v628 = vpop.f32.mrb[0].mxu0
    %v629 = vadd.f32 %v573, %v628
    %v630 = vpop.f32.mrb[0].mxu0
    %v631 = vpop.f32.mrb[0].mxu0
    %v632 = vadd.f32 %v576, %v631
    %v633 = vpop.f32.mrb[0].mxu0
    %634 = vdwg.mxu0
    %v635 = vld [vmem:[%s1 + $0x3] sm:$0x1]
    %v636 = vlaneseq
    %v637 = vshrl.u32 %v636, 7
    %v638 = vsub.s32 0, %v637
    %v639 = vrot.slane %v635, %v638
    %v640 = vadd.f32 %v629, %v639
    %v641 = vadd.f32 %v632, %v639
    %v642 = vld [vmem:[%s1 + $0x4] sm:$0x1]
    %v643 = vld [vmem:[%s1 + $0x5] sm:$0x1]
    %vm644 = vcmask 523264
    %v645 = vsel %vm644, %v640, 0.0
    %646 = vadd.xlane.f32.xlu0 %v645
    %v647 = vpop.xlane.xlu0 %646
    %v648 = vsel %vm644, %v641, 0.0
    %649 = vadd.xlane.f32.xlu0 %v648
    %v650 = vpop.xlane.xlu0 %649
    %v651 = vrcp.pop 64.0
    %v652 = vmul.f32 %v647, %v651
    %v653 = vmul.f32 %v650, %v651
    %v654 = vsub.f32 %v640, %v652
    %v655 = vsub.f32 %v641, %v653
    %v656 = vmul.f32 %v654, %v654
    %v657 = vmul.f32 %v655, %v655
    %v658 = vsel %vm644, %v656, 0.0
    %659 = vadd.xlane.f32.xlu0 %v658
    %v660 = vpop.xlane.xlu0 %659
    %v661 = vsel %vm644, %v657, 0.0
    %662 = vadd.xlane.f32.xlu0 %v661
    %v663 = vpop.xlane.xlu0 %662
    %v664 = vmul.f32 %v660, %v651
    %v665 = vmul.f32 %v663, %v651
    %v666 = vadd.f32 %v664, 1e-05
    %v667 = vadd.f32 %v665, 1e-05
    %v668 = vrsqrt.pop %v666
    %v669 = vrsqrt.pop %v667
    %v670 = vmul.f32 %v654, %v668
    %v671 = vmul.f32 %v655, %v669
    %v672 = vlaneseq
    %v673 = vshrl.u32 %v672, 7
    %v674 = vsub.s32 0, %v673
    %v675 = vrot.slane %v642, %v674
    %v676 = vmul.f32 %v670, %v675
    %v677 = vmul.f32 %v671, %v675
    %v678 = vlaneseq
    %v679 = vshrl.u32 %v678, 7
    %v680 = vsub.s32 0, %v679
    %v681 = vrot.slane %v643, %v680
    %v682 = vadd.f32 %v676, %v681
    %v683 = vadd.f32 %v677, %v681
    %vm684 = vcmp.gt.f32.partialorder %v682, 0.0
    %vm685 = vcmp.gt.f32.partialorder %v683, 0.0
    %v686 = vmul.f32 %v682, 0.01
    %v687 = vmul.f32 %v683, 0.01
    %v688 = vsel %vm684, %v682, %v686
    %v689 = vsel %vm685, %v683, %v687
    %v690 = vpack.c.bf16 %v689, %v688
    %v691 = vld [vmem:[%s3] sm:$0xf]
    %v692 = vld [vmem:[%s3 + $0x4] sm:$0xf]
    %v693 = vld [vmem:[%s3 + $0x8] sm:$0xf]
    %v694 = vld [vmem:[%s3 + $0xc] sm:$0xf]
    %v695 = vld [vmem:[%s3 + $0x10] sm:$0xf]
    %v696 = vld [vmem:[%s3 + $0x14] sm:$0xf]
    %v697 = vld [vmem:[%s3 + $0x18] sm:$0xf]
    %v698 = vld [vmem:[%s3 + $0x1c] sm:$0xf]
    %v699 = vld [vmem:[%s1 + $0x6] sm:$0x1]
    %v700 = vlaneseq
    %v701 = vshrl.u32 %v700, 7
    %v702 = vsub.s32 0, %v701
    %v703 = vrot.slane %v699, %v702
    %v712 = vunpack.c.l.b16 %v691
    %v713 = vunpack.c.l.b16 %v692
    %v714 = vunpack.c.l.b16 %v693
    %v715 = vunpack.c.l.b16 %v694
    %v716 = vunpack.c.l.b16 %v695
    %v717 = vunpack.c.l.b16 %v696
    %v718 = vunpack.c.l.b16 %v697
    %v719 = vunpack.c.l.b16 %v698
    %v720 = vpack.c.b16 %v713, %v712
    %v721 = vpack.c.b16 %v715, %v714
    %v722 = vpack.c.b16 %v717, %v716
    %v723 = vpack.c.b16 %v719, %v718
    %v729 = vsel %vm644, %v690, 0
    %731 = vmatprep.subr.bf16.mxu0 0
    %732 = vmatpush1.bf16.msra.mxu0 %v720
    %733 = vmatprep.subr.bf16.mxu0 0
    %734 = vmatpush1.bf16.msra.mxu0 %v721
    %735 = vmatprep.subr.bf16.mxu0 0
    %736 = vmatpush1.bf16.msra.mxu0 %v722
    %737 = vmatprep.subr.bf16.mxu0 0
    %738 = vmatpush1.bf16.msra.mxu0 %v723
    %739 = vmatprep.subr.bf16.mxu0 0
    %740 = vmatpush1.bf16.msra.mxu0 0
    %741 = vmatprep.subr.bf16.mxu0 0
    %742 = vmatpush1.bf16.msra.mxu0 0
    %743 = vmatprep.subr.bf16.mxu0 0
    %744 = vmatpush1.bf16.msra.mxu0 0
    %745 = vmatprep.subr.bf16.mxu0 0
    %746 = vmatpush1.bf16.msra.mxu0 0
    %747 = vmatprep.subr.bf16.mxu0 0
    %748 = vmatpush1.bf16.msra.mxu0 0
    %749 = vmatprep.subr.bf16.mxu0 0
    %750 = vmatpush1.bf16.msra.mxu0 0
    %751 = vmatprep.subr.bf16.mxu0 0
    %752 = vmatpush1.bf16.msra.mxu0 0
    %753 = vmatprep.subr.bf16.mxu0 0
    %754 = vmatpush1.bf16.msra.mxu0 0
    %755 = vmatprep.subr.bf16.mxu0 0
    %756 = vmatpush1.bf16.msra.mxu0 0
    %757 = vmatprep.subr.bf16.mxu0 0
    %758 = vmatpush1.bf16.msra.mxu0 0
    %759 = vmatprep.subr.bf16.mxu0 0
    %760 = vmatpush1.bf16.msra.mxu0 0
    %761 = vmatprep.subr.bf16.mxu0 0
    %762 = vmatpush1.bf16.msra.mxu0 0
    %763 = vmatprep.mubr.bf16.mxu0 0
    %764 = vmatmul.mubr.bf16.gmra.mrb[0].mxu0 %v729
    %v765 = vpop.f32.mrb[0].mxu0
    %v766 = vadd.f32 %v703, %v765
    %v767 = vpop.f32.mrb[0].mxu0
    %v768 = vpop.f32.mrb[0].mxu0
    %v769 = vadd.f32 %v703, %v768
    %v770 = vpop.f32.mrb[0].mxu0
    %771 = vdwg.mxu0
    %v772 = vld [vmem:[%s1 + $0x7] sm:$0x1]
    %v773 = vld [vmem:[%s1 + $0x8] sm:$0x1]
    %v774 = vsel %vm644, %v766, 0.0
    %775 = vadd.xlane.f32.xlu0 %v774
    %v776 = vpop.xlane.xlu0 %775
    %v777 = vsel %vm644, %v769, 0.0
    %778 = vadd.xlane.f32.xlu0 %v777
    %v779 = vpop.xlane.xlu0 %778
    %v780 = vmul.f32 %v776, %v651
    %v781 = vmul.f32 %v779, %v651
    %v782 = vsub.f32 %v766, %v780
    %v783 = vsub.f32 %v769, %v781
    %v784 = vmul.f32 %v782, %v782
    %v785 = vmul.f32 %v783, %v783
    %v786 = vsel %vm644, %v784, 0.0
    %787 = vadd.xlane.f32.xlu0 %v786
    %v788 = vpop.xlane.xlu0 %787
    %v789 = vsel %vm644, %v785, 0.0
    %790 = vadd.xlane.f32.xlu0 %v789
    %v791 = vpop.xlane.xlu0 %790
    %v792 = vmul.f32 %v788, %v651
    %v793 = vmul.f32 %v791, %v651
    %v794 = vadd.f32 %v792, 1e-05
    %v795 = vadd.f32 %v793, 1e-05
    %v796 = vrsqrt.pop %v794
    %v797 = vrsqrt.pop %v795
    %v798 = vmul.f32 %v782, %v796
    %v799 = vmul.f32 %v783, %v797
    %v800 = vlaneseq
    %v801 = vshrl.u32 %v800, 7
    %v802 = vsub.s32 0, %v801
    %v803 = vrot.slane %v772, %v802
    %v804 = vmul.f32 %v798, %v803
    %v805 = vmul.f32 %v799, %v803
    %v806 = vlaneseq
    %v807 = vshrl.u32 %v806, 7
    %v808 = vsub.s32 0, %v807
    %v809 = vrot.slane %v773, %v808
    %v810 = vadd.f32 %v804, %v809
    %v811 = vadd.f32 %v805, %v809
    %vm812 = vcmp.gt.f32.partialorder %v810, 0.0
    %vm813 = vcmp.gt.f32.partialorder %v811, 0.0
    %v814 = vmul.f32 %v810, 0.01
    %v815 = vmul.f32 %v811, 0.01
    %v816 = vsel %vm812, %v810, %v814
    %v817 = vsel %vm813, %v811, %v815
    %v818 = vpack.c.bf16 %v817, %v816
    %v819 = vld [vmem:[#allocation2] sm:$0xff]
    %v820 = vld [vmem:[#allocation2 + $0x8] sm:$0xff]
    %v821 = vld [vmem:[#allocation2 + $0x10] sm:$0xff]
    %v822 = vld [vmem:[#allocation2 + $0x30] sm:$0xff]
    %v823 = vld [vmem:[#allocation2 + $0x38] sm:$0xff]
    %v824 = vld [vmem:[#allocation2 + $0x40] sm:$0xff]
    %v825 = vld [vmem:[#allocation2 + $0x60] sm:$0xff]
    %v826 = vld [vmem:[#allocation2 + $0x68] sm:$0xff]
    %v827 = vld [vmem:[#allocation2 + $0x70] sm:$0xff]
    %v828 = vld [vmem:[#allocation2 + $0x90] sm:$0xff]
    %v829 = vld [vmem:[#allocation2 + $0x98] sm:$0xff]
    %v830 = vld [vmem:[#allocation2 + $0xa0] sm:$0xff]
    %v831 = vld [vmem:[#allocation2 + $0xc0] sm:$0xff]
    %v832 = vld [vmem:[#allocation2 + $0xc8] sm:$0xff]
    %v833 = vld [vmem:[#allocation2 + $0xd0] sm:$0xff]
    %v834 = vld [vmem:[#allocation2 + $0xf0] sm:$0xff]
    %v835 = vld [vmem:[#allocation2 + $0xf8] sm:$0xff]
    %v836 = vld [vmem:[#allocation2 + $0x100] sm:$0xff]
    %v837 = vld [vmem:[#allocation2 + $0x120] sm:$0xff]
    %v838 = vld [vmem:[#allocation2 + $0x128] sm:$0xff]
    %v839 = vld [vmem:[#allocation2 + $0x130] sm:$0xff]
    %v840 = vld [vmem:[#allocation2 + $0x150] sm:$0xff]
    %v841 = vld [vmem:[#allocation2 + $0x158] sm:$0xff]
    %v842 = vld [vmem:[#allocation2 + $0x160] sm:$0xff]
    %v843 = vld [vmem:[%s5] sm:$0x3f]
    %v845 = vlaneseq
    %v846 = vshrl.u32 %v845, 7
    %v847 = vsub.s32 0, %v846
    %v848 = vrot.slane %v843, %v847
    %v849 = vlaneseq
    %v850 = vshrl.u32 %v849, 7
    %v851 = vsub.s32 1, %v850
    %v852 = vrot.slane %v843, %v851
    %v853 = vlaneseq
    %v854 = vshrl.u32 %v853, 7
    %v855 = vsub.s32 2, %v854
    %v856 = vrot.slane %v843, %v855
    %v857 = vlaneseq
    %v858 = vshrl.u32 %v857, 7
    %v859 = vsub.s32 3, %v858
    %v860 = vrot.slane %v843, %v859
    %v861 = vlaneseq
    %v862 = vshrl.u32 %v861, 7
    %v863 = vsub.s32 4, %v862
    %v864 = vrot.slane %v843, %v863
    %v865 = vlaneseq
    %v866 = vshrl.u32 %v865, 7
    %v867 = vsub.s32 5, %v866
    %v868 = vrot.slane %v843, %v867
    %v899 = vunpack.c.l.b16 %v819
    %v900 = vunpack.c.h.b16 %v819
    %v901 = vunpack.c.l.b16 %v820
    %v902 = vunpack.c.h.b16 %v820
    %v903 = vunpack.c.l.b16 %v821
    %v904 = vunpack.c.h.b16 %v821
    %v905 = vunpack.c.l.b16 %v822
    %v906 = vunpack.c.h.b16 %v822
    %v907 = vunpack.c.l.b16 %v823
    %v908 = vunpack.c.h.b16 %v823
    %v909 = vunpack.c.l.b16 %v824
    %v910 = vunpack.c.h.b16 %v824
    %v911 = vunpack.c.l.b16 %v825
    %v912 = vunpack.c.h.b16 %v825
    %v913 = vunpack.c.l.b16 %v826
    %v914 = vunpack.c.h.b16 %v826
    %v915 = vunpack.c.l.b16 %v827
    %v916 = vunpack.c.h.b16 %v827
    %v917 = vunpack.c.l.b16 %v828
    %v918 = vunpack.c.h.b16 %v828
    %v919 = vunpack.c.l.b16 %v829
    %v920 = vunpack.c.h.b16 %v829
    %v921 = vunpack.c.l.b16 %v830
    %v922 = vunpack.c.h.b16 %v830
    %v923 = vunpack.c.l.b16 %v831
    %v924 = vunpack.c.h.b16 %v831
    %v925 = vunpack.c.l.b16 %v832
    %v926 = vunpack.c.h.b16 %v832
    %v927 = vunpack.c.l.b16 %v833
    %v928 = vunpack.c.h.b16 %v833
    %v929 = vunpack.c.l.b16 %v834
    %v930 = vunpack.c.h.b16 %v834
    %v931 = vunpack.c.l.b16 %v835
    %v932 = vunpack.c.h.b16 %v835
    %v933 = vunpack.c.l.b16 %v836
    %v934 = vunpack.c.h.b16 %v836
    %v935 = vunpack.c.l.b16 %v837
    %v936 = vunpack.c.h.b16 %v837
    %v937 = vunpack.c.l.b16 %v838
    %v938 = vunpack.c.h.b16 %v838
    %v939 = vunpack.c.l.b16 %v839
    %v940 = vunpack.c.h.b16 %v839
    %v941 = vunpack.c.l.b16 %v840
    %v942 = vunpack.c.h.b16 %v840
    %v943 = vunpack.c.l.b16 %v841
    %v944 = vunpack.c.h.b16 %v841
    %v945 = vunpack.c.l.b16 %v842
    %v946 = vunpack.c.h.b16 %v842
    %v947 = vpack.c.b16 %v905, %v899
    %v948 = vpack.c.b16 %v906, %v900
    %v949 = vpack.c.b16 %v907, %v901
    %v950 = vpack.c.b16 %v908, %v902
    %v951 = vpack.c.b16 %v909, %v903
    %v952 = vpack.c.b16 %v910, %v904
    %v953 = vpack.c.b16 %v917, %v911
    %v954 = vpack.c.b16 %v918, %v912
    %v955 = vpack.c.b16 %v919, %v913
    %v956 = vpack.c.b16 %v920, %v914
    %v957 = vpack.c.b16 %v921, %v915
    %v958 = vpack.c.b16 %v922, %v916
    %v959 = vpack.c.b16 %v929, %v923
    %v960 = vpack.c.b16 %v930, %v924
    %v961 = vpack.c.b16 %v931, %v925
    %v962 = vpack.c.b16 %v932, %v926
    %v963 = vpack.c.b16 %v933, %v927
    %v964 = vpack.c.b16 %v934, %v928
    %v965 = vpack.c.b16 %v941, %v935
    %v966 = vpack.c.b16 %v942, %v936
    %v967 = vpack.c.b16 %v943, %v937
    %v968 = vpack.c.b16 %v944, %v938
    %v969 = vpack.c.b16 %v945, %v939
    %v970 = vpack.c.b16 %v946, %v940
    %v996 = vsel %vm644, %v818, 0
    %998 = vmatprep.subr.bf16.mxu0 %v948
    %999 = vmatpush1.bf16.msra.mxu0 %v947
    %1000 = vmatprep.subr.bf16.mxu0 %v954
    %1001 = vmatpush1.bf16.msra.mxu0 %v953
    %1002 = vmatprep.subr.bf16.mxu0 %v960
    %1003 = vmatpush1.bf16.msra.mxu0 %v959
    %1004 = vmatprep.subr.bf16.mxu0 %v966
    %1005 = vmatpush1.bf16.msra.mxu0 %v965
    %1006 = vmatprep.subr.bf16.mxu0 0
    %1007 = vmatpush1.bf16.msra.mxu0 0
    %1008 = vmatprep.subr.bf16.mxu0 0
    %1009 = vmatpush1.bf16.msra.mxu0 0
    %1010 = vmatprep.subr.bf16.mxu0 0
    %1011 = vmatpush1.bf16.msra.mxu0 0
    %1012 = vmatprep.subr.bf16.mxu0 0
    %1013 = vmatpush1.bf16.msra.mxu0 0
    %1014 = vmatprep.subr.bf16.mxu0 0
    %1015 = vmatpush1.bf16.msra.mxu0 0
    %1016 = vmatprep.subr.bf16.mxu0 0
    %1017 = vmatpush1.bf16.msra.mxu0 0
    %1018 = vmatprep.subr.bf16.mxu0 0
    %1019 = vmatpush1.bf16.msra.mxu0 0
    %1020 = vmatprep.subr.bf16.mxu0 0
    %1021 = vmatpush1.bf16.msra.mxu0 0
    %1022 = vmatprep.subr.bf16.mxu0 0
    %1023 = vmatpush1.bf16.msra.mxu0 0
    %1024 = vmatprep.subr.bf16.mxu0 0
    %1025 = vmatpush1.bf16.msra.mxu0 0
    %1026 = vmatprep.subr.bf16.mxu0 0
    %1027 = vmatpush1.bf16.msra.mxu0 0
    %1028 = vmatprep.subr.bf16.mxu0 0
    %1029 = vmatpush1.bf16.msra.mxu0 0
    %1030 = vmatprep.mubr.bf16.mxu0 0
    %1031 = vmatmul.mubr.bf16.gmra.mrb[0].mxu0 %v996
    %v1032 = vpop.f32.mrb[0].mxu0
    %v1033 = vadd.f32 %v848, %v1032
    %v1034 = vpop.f32.mrb[0].mxu0
    %v1035 = vadd.f32 %v852, %v1034
    %v1036 = vpop.f32.mrb[0].mxu0
    %v1037 = vadd.f32 %v848, %v1036
    %v1038 = vpop.f32.mrb[0].mxu0
    %v1039 = vadd.f32 %v852, %v1038
    %1040 = vdwg.mxu0
    %1041 = vmatprep.subr.bf16.mxu0 %v950
    %1042 = vmatpush1.bf16.msra.mxu0 %v949
    %1043 = vmatprep.subr.bf16.mxu0 %v956
    %1044 = vmatpush1.bf16.msra.mxu0 %v955
    %1045 = vmatprep.subr.bf16.mxu0 %v962
    %1046 = vmatpush1.bf16.msra.mxu0 %v961
    %1047 = vmatprep.subr.bf16.mxu0 %v968
    %1048 = vmatpush1.bf16.msra.mxu0 %v967
    %1049 = vmatprep.subr.bf16.mxu0 0
    %1050 = vmatpush1.bf16.msra.mxu0 0
    %1051 = vmatprep.subr.bf16.mxu0 0
    %1052 = vmatpush1.bf16.msra.mxu0 0
    %1053 = vmatprep.subr.bf16.mxu0 0
    %1054 = vmatpush1.bf16.msra.mxu0 0
    %1055 = vmatprep.subr.bf16.mxu0 0
    %1056 = vmatpush1.bf16.msra.mxu0 0
    %1057 = vmatprep.subr.bf16.mxu0 0
    %1058 = vmatpush1.bf16.msra.mxu0 0
    %1059 = vmatprep.subr.bf16.mxu0 0
    %1060 = vmatpush1.bf16.msra.mxu0 0
    %1061 = vmatprep.subr.bf16.mxu0 0
    %1062 = vmatpush1.bf16.msra.mxu0 0
    %1063 = vmatprep.subr.bf16.mxu0 0
    %1064 = vmatpush1.bf16.msra.mxu0 0
    %1065 = vmatprep.subr.bf16.mxu0 0
    %1066 = vmatpush1.bf16.msra.mxu0 0
    %1067 = vmatprep.subr.bf16.mxu0 0
    %1068 = vmatpush1.bf16.msra.mxu0 0
    %1069 = vmatprep.subr.bf16.mxu0 0
    %1070 = vmatpush1.bf16.msra.mxu0 0
    %1071 = vmatprep.subr.bf16.mxu0 0
    %1072 = vmatpush1.bf16.msra.mxu0 0
    %1073 = vmatprep.mubr.bf16.mxu0 0
    %1074 = vmatmul.mubr.bf16.gmra.mrb[0].mxu0 %v996
    %v1075 = vpop.f32.mrb[0].mxu0
    %v1076 = vadd.f32 %v856, %v1075
    %v1077 = vpop.f32.mrb[0].mxu0
    %v1078 = vadd.f32 %v860, %v1077
    %v1079 = vpop.f32.mrb[0].mxu0
    %v1080 = vadd.f32 %v856, %v1079
    %v1081 = vpop.f32.mrb[0].mxu0
    %v1082 = vadd.f32 %v860, %v1081
    %1083 = vdwg.mxu0
    %1084 = vmatprep.subr.bf16.mxu0 %v952
    %1085 = vmatpush1.bf16.msra.mxu0 %v951
    %1086 = vmatprep.subr.bf16.mxu0 %v958
    %1087 = vmatpush1.bf16.msra.mxu0 %v957
    %1088 = vmatprep.subr.bf16.mxu0 %v964
    %1089 = vmatpush1.bf16.msra.mxu0 %v963
    %1090 = vmatprep.subr.bf16.mxu0 %v970
    %1091 = vmatpush1.bf16.msra.mxu0 %v969
    %1092 = vmatprep.subr.bf16.mxu0 0
    %1093 = vmatpush1.bf16.msra.mxu0 0
    %1094 = vmatprep.subr.bf16.mxu0 0
    %1095 = vmatpush1.bf16.msra.mxu0 0
    %1096 = vmatprep.subr.bf16.mxu0 0
    %1097 = vmatpush1.bf16.msra.mxu0 0
    %1098 = vmatprep.subr.bf16.mxu0 0
    %1099 = vmatpush1.bf16.msra.mxu0 0
    %1100 = vmatprep.subr.bf16.mxu0 0
    %1101 = vmatpush1.bf16.msra.mxu0 0
    %1102 = vmatprep.subr.bf16.mxu0 0
    %1103 = vmatpush1.bf16.msra.mxu0 0
    %1104 = vmatprep.subr.bf16.mxu0 0
    %1105 = vmatpush1.bf16.msra.mxu0 0
    %1106 = vmatprep.subr.bf16.mxu0 0
    %1107 = vmatpush1.bf16.msra.mxu0 0
    %1108 = vmatprep.subr.bf16.mxu0 0
    %1109 = vmatpush1.bf16.msra.mxu0 0
    %1110 = vmatprep.subr.bf16.mxu0 0
    %1111 = vmatpush1.bf16.msra.mxu0 0
    %1112 = vmatprep.subr.bf16.mxu0 0
    %1113 = vmatpush1.bf16.msra.mxu0 0
    %1114 = vmatprep.subr.bf16.mxu0 0
    %1115 = vmatpush1.bf16.msra.mxu0 0
    %1116 = vmatprep.mubr.bf16.mxu0 0
    %1117 = vmatmul.mubr.bf16.gmra.mrb[0].mxu0 %v996
    %v1118 = vpop.f32.mrb[0].mxu0
    %v1119 = vadd.f32 %v864, %v1118
    %v1120 = vpop.f32.mrb[0].mxu0
    %v1121 = vadd.f32 %v868, %v1120
    %v1122 = vpop.f32.mrb[0].mxu0
    %v1123 = vadd.f32 %v864, %v1122
    %v1124 = vpop.f32.mrb[0].mxu0
    %v1125 = vadd.f32 %v868, %v1124
    %1126 = vdwg.mxu0
    %1127 = vst [vmem:[%s6] sm:$0xff] %v1033
    %1128 = vst [vmem:[%s6 + $0x8] sm:$0xff] %v1035
    %1129 = vst [vmem:[%s6 + $0x10] sm:$0xff] %v1076
    %1130 = vst [vmem:[%s6 + $0x18] sm:$0xff] %v1078
    %1131 = vst [vmem:[%s6 + $0x20] sm:$0xff] %v1119
    %1132 = vst [vmem:[%s6 + $0x28] sm:$0xff] %v1121
    %1133 = vst [vmem:[%s6 + $0x30] sm:$0xff] %v1037
    %1134 = vst [vmem:[%s6 + $0x38] sm:$0xff] %v1039
    %1135 = vst [vmem:[%s6 + $0x40] sm:$0xff] %v1080
    %1136 = vst [vmem:[%s6 + $0x48] sm:$0xff] %v1082
    %1137 = vst [vmem:[%s6 + $0x50] sm:$0xff] %v1123
    %1138 = vst [vmem:[%s6 + $0x58] sm:$0xff] %v1125
    %v1139 = vld [vmem:[#allocation2 + $0x18] sm:$0xff]
    %v1140 = vld [vmem:[#allocation2 + $0x20] sm:$0xff]
    %v1141 = vld [vmem:[#allocation2 + $0x28] sm:$0xff]
    %v1142 = vld [vmem:[#allocation2 + $0x48] sm:$0xff]
    %v1143 = vld [vmem:[#allocation2 + $0x50] sm:$0xff]
    %v1144 = vld [vmem:[#allocation2 + $0x58] sm:$0xff]
    %v1145 = vld [vmem:[#allocation2 + $0x78] sm:$0xff]
    %v1146 = vld [vmem:[#allocation2 + $0x80] sm:$0xff]
    %v1147 = vld [vmem:[#allocation2 + $0x88] sm:$0xff]
    %v1148 = vld [vmem:[#allocation2 + $0xa8] sm:$0xff]
    %v1149 = vld [vmem:[#allocation2 + $0xb0] sm:$0xff]
    %v1150 = vld [vmem:[#allocation2 + $0xb8] sm:$0xff]
    %v1151 = vld [vmem:[#allocation2 + $0xd8] sm:$0xff]
    %v1152 = vld [vmem:[#allocation2 + $0xe0] sm:$0xff]
    %v1153 = vld [vmem:[#allocation2 + $0xe8] sm:$0xff]
    %v1154 = vld [vmem:[#allocation2 + $0x108] sm:$0xff]
    %v1155 = vld [vmem:[#allocation2 + $0x110] sm:$0xff]
    %v1156 = vld [vmem:[#allocation2 + $0x118] sm:$0xff]
    %v1157 = vld [vmem:[#allocation2 + $0x138] sm:$0xff]
    %v1158 = vld [vmem:[#allocation2 + $0x140] sm:$0xff]
    %v1159 = vld [vmem:[#allocation2 + $0x148] sm:$0xff]
    %v1160 = vld [vmem:[#allocation2 + $0x168] sm:$0xff]
    %v1161 = vld [vmem:[#allocation2 + $0x170] sm:$0xff]
    %v1162 = vld [vmem:[#allocation2 + $0x178] sm:$0xff]
    %v1163 = vld [vmem:[%s5 + $0x6] sm:$0x3f]
    %v1165 = vlaneseq
    %v1166 = vshrl.u32 %v1165, 7
    %v1167 = vsub.s32 0, %v1166
    %v1168 = vrot.slane %v1163, %v1167
    %v1169 = vlaneseq
    %v1170 = vshrl.u32 %v1169, 7
    %v1171 = vsub.s32 1, %v1170
    %v1172 = vrot.slane %v1163, %v1171
    %v1173 = vlaneseq
    %v1174 = vshrl.u32 %v1173, 7
    %v1175 = vsub.s32 2, %v1174
    %v1176 = vrot.slane %v1163, %v1175
    %v1177 = vlaneseq
    %v1178 = vshrl.u32 %v1177, 7
    %v1179 = vsub.s32 3, %v1178
    %v1180 = vrot.slane %v1163, %v1179
    %v1181 = vlaneseq
    %v1182 = vshrl.u32 %v1181, 7
    %v1183 = vsub.s32 4, %v1182
    %v1184 = vrot.slane %v1163, %v1183
    %v1185 = vlaneseq
    %v1186 = vshrl.u32 %v1185, 7
    %v1187 = vsub.s32 5, %v1186
    %v1188 = vrot.slane %v1163, %v1187
    %v1219 = vunpack.c.l.b16 %v1139
    %v1220 = vunpack.c.h.b16 %v1139
    %v1221 = vunpack.c.l.b16 %v1140
    %v1222 = vunpack.c.h.b16 %v1140
    %v1223 = vunpack.c.l.b16 %v1141
    %v1224 = vunpack.c.h.b16 %v1141
    %v1225 = vunpack.c.l.b16 %v1142
    %v1226 = vunpack.c.h.b16 %v1142
    %v1227 = vunpack.c.l.b16 %v1143
    %v1228 = vunpack.c.h.b16 %v1143
    %v1229 = vunpack.c.l.b16 %v1144
    %v1230 = vunpack.c.h.b16 %v1144
    %v1231 = vunpack.c.l.b16 %v1145
    %v1232 = vunpack.c.h.b16 %v1145
    %v1233 = vunpack.c.l.b16 %v1146
    %v1234 = vunpack.c.h.b16 %v1146
    %v1235 = vunpack.c.l.b16 %v1147
    %v1236 = vunpack.c.h.b16 %v1147
    %v1237 = vunpack.c.l.b16 %v1148
    %v1238 = vunpack.c.h.b16 %v1148
    %v1239 = vunpack.c.l.b16 %v1149
    %v1240 = vunpack.c.h.b16 %v1149
    %v1241 = vunpack.c.l.b16 %v1150
    %v1242 = vunpack.c.h.b16 %v1150
    %v1243 = vunpack.c.l.b16 %v1151
    %v1244 = vunpack.c.h.b16 %v1151
    %v1245 = vunpack.c.l.b16 %v1152
    %v1246 = vunpack.c.h.b16 %v1152
    %v1247 = vunpack.c.l.b16 %v1153
    %v1248 = vunpack.c.h.b16 %v1153
    %v1249 = vunpack.c.l.b16 %v1154
    %v1250 = vunpack.c.h.b16 %v1154
    %v1251 = vunpack.c.l.b16 %v1155
    %v1252 = vunpack.c.h.b16 %v1155
    %v1253 = vunpack.c.l.b16 %v1156
    %v1254 = vunpack.c.h.b16 %v1156
    %v1255 = vunpack.c.l.b16 %v1157
    %v1256 = vunpack.c.h.b16 %v1157
    %v1257 = vunpack.c.l.b16 %v1158
    %v1258 = vunpack.c.h.b16 %v1158
    %v1259 = vunpack.c.l.b16 %v1159
    %v1260 = vunpack.c.h.b16 %v1159
    %v1261 = vunpack.c.l.b16 %v1160
    %v1262 = vunpack.c.h.b16 %v1160
    %v1263 = vunpack.c.l.b16 %v1161
    %v1264 = vunpack.c.h.b16 %v1161
    %v1265 = vunpack.c.l.b16 %v1162
    %v1266 = vunpack.c.h.b16 %v1162
    %v1267 = vpack.c.b16 %v1225, %v1219
    %v1268 = vpack.c.b16 %v1226, %v1220
    %v1269 = vpack.c.b16 %v1227, %v1221
    %v1270 = vpack.c.b16 %v1228, %v1222
    %v1271 = vpack.c.b16 %v1229, %v1223
    %v1272 = vpack.c.b16 %v1230, %v1224
    %v1273 = vpack.c.b16 %v1237, %v1231
    %v1274 = vpack.c.b16 %v1238, %v1232
    %v1275 = vpack.c.b16 %v1239, %v1233
    %v1276 = vpack.c.b16 %v1240, %v1234
    %v1277 = vpack.c.b16 %v1241, %v1235
    %v1278 = vpack.c.b16 %v1242, %v1236
    %v1279 = vpack.c.b16 %v1249, %v1243
    %v1280 = vpack.c.b16 %v1250, %v1244
    %v1281 = vpack.c.b16 %v1251, %v1245
    %v1282 = vpack.c.b16 %v1252, %v1246
    %v1283 = vpack.c.b16 %v1253, %v1247
    %v1284 = vpack.c.b16 %v1254, %v1248
    %v1285 = vpack.c.b16 %v1261, %v1255
    %v1286 = vpack.c.b16 %v1262, %v1256
    %v1287 = vpack.c.b16 %v1263, %v1257
    %v1288 = vpack.c.b16 %v1264, %v1258
    %v1289 = vpack.c.b16 %v1265, %v1259
    %v1290 = vpack.c.b16 %v1266, %v1260
    %1315 = vmatprep.subr.bf16.mxu0 %v1268
    %1316 = vmatpush1.bf16.msra.mxu0 %v1267
    %1317 = vmatprep.subr.bf16.mxu0 %v1274
    %1318 = vmatpush1.bf16.msra.mxu0 %v1273
    %1319 = vmatprep.subr.bf16.mxu0 %v1280
    %1320 = vmatpush1.bf16.msra.mxu0 %v1279
    %1321 = vmatprep.subr.bf16.mxu0 %v1286
    %1322 = vmatpush1.bf16.msra.mxu0 %v1285
    %1323 = vmatprep.subr.bf16.mxu0 0
    %1324 = vmatpush1.bf16.msra.mxu0 0
    %1325 = vmatprep.subr.bf16.mxu0 0
    %1326 = vmatpush1.bf16.msra.mxu0 0
    %1327 = vmatprep.subr.bf16.mxu0 0
    %1328 = vmatpush1.bf16.msra.mxu0 0
    %1329 = vmatprep.subr.bf16.mxu0 0
    %1330 = vmatpush1.bf16.msra.mxu0 0
    %1331 = vmatprep.subr.bf16.mxu0 0
    %1332 = vmatpush1.bf16.msra.mxu0 0
    %1333 = vmatprep.subr.bf16.mxu0 0
    %1334 = vmatpush1.bf16.msra.mxu0 0
    %1335 = vmatprep.subr.bf16.mxu0 0
    %1336 = vmatpush1.bf16.msra.mxu0 0
    %1337 = vmatprep.subr.bf16.mxu0 0
    %1338 = vmatpush1.bf16.msra.mxu0 0
    %1339 = vmatprep.subr.bf16.mxu0 0
    %1340 = vmatpush1.bf16.msra.mxu0 0
    %1341 = vmatprep.subr.bf16.mxu0 0
    %1342 = vmatpush1.bf16.msra.mxu0 0
    %1343 = vmatprep.subr.bf16.mxu0 0
    %1344 = vmatpush1.bf16.msra.mxu0 0
    %1345 = vmatprep.subr.bf16.mxu0 0
    %1346 = vmatpush1.bf16.msra.mxu0 0
    %1347 = vmatprep.mubr.bf16.mxu0 0
    %1348 = vmatmul.mubr.bf16.gmra.mrb[0].mxu0 %v996
    %v1349 = vpop.f32.mrb[0].mxu0
    %v1350 = vadd.f32 %v1168, %v1349
    %v1351 = vpop.f32.mrb[0].mxu0
    %v1352 = vadd.f32 %v1172, %v1351
    %v1353 = vpop.f32.mrb[0].mxu0
    %v1354 = vadd.f32 %v1168, %v1353
    %v1355 = vpop.f32.mrb[0].mxu0
    %v1356 = vadd.f32 %v1172, %v1355
    %1357 = vdwg.mxu0
    %1358 = vmatprep.subr.bf16.mxu0 %v1270
    %1359 = vmatpush1.bf16.msra.mxu0 %v1269
    %1360 = vmatprep.subr.bf16.mxu0 %v1276
    %1361 = vmatpush1.bf16.msra.mxu0 %v1275
    %1362 = vmatprep.subr.bf16.mxu0 %v1282
    %1363 = vmatpush1.bf16.msra.mxu0 %v1281
    %1364 = vmatprep.subr.bf16.mxu0 %v1288
    %1365 = vmatpush1.bf16.msra.mxu0 %v1287
    %1366 = vmatprep.subr.bf16.mxu0 0
    %1367 = vmatpush1.bf16.msra.mxu0 0
    %1368 = vmatprep.subr.bf16.mxu0 0
    %1369 = vmatpush1.bf16.msra.mxu0 0
    %1370 = vmatprep.subr.bf16.mxu0 0
    %1371 = vmatpush1.bf16.msra.mxu0 0
    %1372 = vmatprep.subr.bf16.mxu0 0
    %1373 = vmatpush1.bf16.msra.mxu0 0
    %1374 = vmatprep.subr.bf16.mxu0 0
    %1375 = vmatpush1.bf16.msra.mxu0 0
    %1376 = vmatprep.subr.bf16.mxu0 0
    %1377 = vmatpush1.bf16.msra.mxu0 0
    %1378 = vmatprep.subr.bf16.mxu0 0
    %1379 = vmatpush1.bf16.msra.mxu0 0
    %1380 = vmatprep.subr.bf16.mxu0 0
    %1381 = vmatpush1.bf16.msra.mxu0 0
    %1382 = vmatprep.subr.bf16.mxu0 0
    %1383 = vmatpush1.bf16.msra.mxu0 0
    %1384 = vmatprep.subr.bf16.mxu0 0
    %1385 = vmatpush1.bf16.msra.mxu0 0
    %1386 = vmatprep.subr.bf16.mxu0 0
    %1387 = vmatpush1.bf16.msra.mxu0 0
    %1388 = vmatprep.subr.bf16.mxu0 0
    %1389 = vmatpush1.bf16.msra.mxu0 0
    %1390 = vmatprep.mubr.bf16.mxu0 0
    %1391 = vmatmul.mubr.bf16.gmra.mrb[0].mxu0 %v996
    %v1392 = vpop.f32.mrb[0].mxu0
    %v1393 = vadd.f32 %v1176, %v1392
    %v1394 = vpop.f32.mrb[0].mxu0
    %v1395 = vadd.f32 %v1180, %v1394
    %v1396 = vpop.f32.mrb[0].mxu0
    %v1397 = vadd.f32 %v1176, %v1396
    %v1398 = vpop.f32.mrb[0].mxu0
    %v1399 = vadd.f32 %v1180, %v1398
    %1400 = vdwg.mxu0
    %1401 = vmatprep.subr.bf16.mxu0 %v1272
    %1402 = vmatpush1.bf16.msra.mxu0 %v1271
    %1403 = vmatprep.subr.bf16.mxu0 %v1278
    %1404 = vmatpush1.bf16.msra.mxu0 %v1277
    %1405 = vmatprep.subr.bf16.mxu0 %v1284
    %1406 = vmatpush1.bf16.msra.mxu0 %v1283
    %1407 = vmatprep.subr.bf16.mxu0 %v1290
    %1408 = vmatpush1.bf16.msra.mxu0 %v1289
    %1409 = vmatprep.subr.bf16.mxu0 0
    %1410 = vmatpush1.bf16.msra.mxu0 0
    %1411 = vmatprep.subr.bf16.mxu0 0
    %1412 = vmatpush1.bf16.msra.mxu0 0
    %1413 = vmatprep.subr.bf16.mxu0 0
    %1414 = vmatpush1.bf16.msra.mxu0 0
    %1415 = vmatprep.subr.bf16.mxu0 0
    %1416 = vmatpush1.bf16.msra.mxu0 0
    %1417 = vmatprep.subr.bf16.mxu0 0
    %1418 = vmatpush1.bf16.msra.mxu0 0
    %1419 = vmatprep.subr.bf16.mxu0 0
    %1420 = vmatpush1.bf16.msra.mxu0 0
    %1421 = vmatprep.subr.bf16.mxu0 0
    %1422 = vmatpush1.bf16.msra.mxu0 0
    %1423 = vmatprep.subr.bf16.mxu0 0
    %1424 = vmatpush1.bf16.msra.mxu0 0
    %1425 = vmatprep.subr.bf16.mxu0 0
    %1426 = vmatpush1.bf16.msra.mxu0 0
    %1427 = vmatprep.subr.bf16.mxu0 0
    %1428 = vmatpush1.bf16.msra.mxu0 0
    %1429 = vmatprep.subr.bf16.mxu0 0
    %1430 = vmatpush1.bf16.msra.mxu0 0
    %1431 = vmatprep.subr.bf16.mxu0 0
    %1432 = vmatpush1.bf16.msra.mxu0 0
    %1433 = vmatprep.mubr.bf16.mxu0 0
    %1434 = vmatmul.mubr.bf16.gmra.mrb[0].mxu0 %v996
    %v1435 = vpop.f32.mrb[0].mxu0
    %v1436 = vadd.f32 %v1184, %v1435
    %v1437 = vpop.f32.mrb[0].mxu0
    %v1438 = vadd.f32 %v1188, %v1437
    %v1439 = vpop.f32.mrb[0].mxu0
    %v1440 = vadd.f32 %v1184, %v1439
    %v1441 = vpop.f32.mrb[0].mxu0
    %v1442 = vadd.f32 %v1188, %v1441
    %1443 = vdwg.mxu0
    %s1444 = scalar_lea.vmem %s6, 96
    %1445 = vst [vmem:[%s1444] sm:$0xff] %v1350
    %1446 = vst [vmem:[%s1444 + $0x8] sm:$0xff] %v1352
    %1447 = vst [vmem:[%s1444 + $0x10] sm:$0xff] %v1393
    %1448 = vst [vmem:[%s1444 + $0x18] sm:$0xff] %v1395
    %1449 = vst [vmem:[%s1444 + $0x20] sm:$0xff] %v1436
    %1450 = vst [vmem:[%s1444 + $0x28] sm:$0xff] %v1438
    %1451 = vst [vmem:[%s1444 + $0x30] sm:$0xff] %v1354
    %1452 = vst [vmem:[%s1444 + $0x38] sm:$0xff] %v1356
    %1453 = vst [vmem:[%s1444 + $0x40] sm:$0xff] %v1397
    %1454 = vst [vmem:[%s1444 + $0x48] sm:$0xff] %v1399
    %1455 = vst [vmem:[%s1444 + $0x50] sm:$0xff] %v1440
    %1456 = vst [vmem:[%s1444 + $0x58] sm:$0xff] %v1442
    // Predicated region
    $region30: #{neti_mapper_forward.1} parent=1 // pred_check
      _
    $region31: #{neti_mapper_forward.1} parent=1 // pred_check_branch
      %1458 = sbr.rel (0) target = $region33
    $region32: #{neti_mapper_forward.1} parent=1 // pred_region
      _
    $region33: #{neti_mapper_forward.1} parent=1 // pred_fallthru
      _
    // Predicated region
    $region34: #{neti_mapper_forward.1} parent=1 // pred_check
      _
    $region35: #{neti_mapper_forward.1} parent=1 // pred_check_branch
      %1460 = sbr.rel (0) target = $region37
    $region36: #{neti_mapper_forward.1} parent=1 // pred_region
      _
    $region37: #{neti_mapper_forward.1} parent=1 // pred_fallthru
      _
    %1461 = vsyncpa [#allocation3], 1

</llo_original>
